<compile_context>
chip_gen: v7x
topology: tpu7x:2x2x1
jax: 0.10.0
libtpu: 0.0.40
codegen_flags: <defaults>
</compile_context>

<pallas_src>
import math

import jax
import jax.numpy as jnp
from jax.experimental import pallas as pl
from jax.experimental.pallas import tpu as pltpu


def _pool3(y):
    """AvgPool2d(3, stride=1, pad=1, count_include_pad=True) on a 2-D value.

    Separable (1,1,1)/3 filter per axis.  Shifts are pltpu.roll rotations
    (XLU) with the wrapped-around border row/column masked to zero — that mask
    IS the zero padding, so no padded scratch buffer is needed.
    """
    h, w = y.shape
    row = jax.lax.broadcasted_iota(jnp.int32, (h, w), 0)
    col = jax.lax.broadcasted_iota(jnp.int32, (h, w), 1)
    # Vertical 3-tap: y[i-1] + y[i] + y[i+1], zero outside the image.
    ym1 = jnp.where(row == 0, 0.0, pltpu.roll(y, shift=1, axis=0))      # y[i-1, j]
    yp1 = jnp.where(row == h - 1, 0.0, pltpu.roll(y, shift=h - 1, axis=0))  # y[i+1, j]
    v = y + ym1 + yp1
    # Horizontal 3-tap on the vertical partial sums.
    vm1 = jnp.where(col == 0, 0.0, pltpu.roll(v, shift=1, axis=1))      # v[i, j-1]
    vp1 = jnp.where(col == w - 1, 0.0, pltpu.roll(v, shift=w - 1, axis=1))  # v[i, j+1]
    return (v + vm1 + vp1) * (1.0 / 9.0)


def _down_pool_mats(h, w):
    """Banded matrices so that  Dv @ y @ Dh  ==  down2(pool3(y))  exactly.

    Per axis the fused filter has taps (1,2,2,1)/6 at input offsets
    2*i-1 .. 2*i+2; offsets outside the image are exactly the pool's zero
    padding (down2 itself never pads), so the fusion is exact at borders.
    """
    def band(d):
        wgt = (jnp.where((d == 0) | (d == 3), 1.0, 0.0)
               + jnp.where((d == 1) | (d == 2), 2.0, 0.0))
        return (wgt * (1.0 / 6.0)).astype(jnp.float32)

    ov = jax.lax.broadcasted_iota(jnp.int32, (h // 2, h), 0)   # output row index
    rv = jax.lax.broadcasted_iota(jnp.int32, (h // 2, h), 1)   # input row index
    dv = band(rv - 2 * ov + 1)                                  # (h/2, h)

    rh = jax.lax.broadcasted_iota(jnp.int32, (w, w // 2), 0)   # input col index
    oh = jax.lax.broadcasted_iota(jnp.int32, (w, w // 2), 1)   # output col index
    dh = band(rh - 2 * oh + 1)                                  # (w, w/2)
    return dv, dh


def _down_pool(y):
    """down2(pool3(y)) for an even-sized 2-D value, as two MXU matmuls."""
    h, w = y.shape
    dv, dh = _down_pool_mats(h, w)
    t = jnp.dot(dv, y, preferred_element_type=jnp.float32)
    return jnp.dot(t, dh, preferred_element_type=jnp.float32)


def _pyramid_kernel(x_ref, t1_ref, t2_ref, t3_ref, t4_ref):
    t1_ref[...] = _pool3(x_ref[...])
    # Feed each level from its just-written output ref so the compiler does not
    # keep extra full-resolution temporaries alive (VMEM pressure, esp. v7x).
    t2_ref[...] = _pool3(_down_pool(t1_ref[...]))
    t3_ref[...] = _pool3(_down_pool(t2_ref[...]))
    # t4 path: pool -> fused(down2∘pool) -> pool.  pool∘pool can NOT be fused
    # into a single filter (the first pool crops before the second zero-pads);
    # that fusion was the border bug in the previous version.
    t4_ref[...] = _pool3(_down_pool(_pool3(t3_ref[...])))


def convert_forward(x):
    """Fused forward pass of `Convert`; x is (..., H, W).  Returns [t1, t2, t3, t4]."""
    lead = x.shape[:-2]
    H, W = x.shape[-2:]
    # down2 is a clean 2x2 average only when every pyramid level has even dims.
    assert H % 8 == 0 and W % 8 == 0, "pyramid assumes H, W divisible by 8"
    B = math.prod(lead)
    xb = x.reshape(B, H, W).astype(jnp.float32)

    out_shape = tuple(
        jax.ShapeDtypeStruct((B, H // s, W // s), jnp.float32) for s in (1, 2, 4, 8)
    )
    out_specs = tuple(
        pl.BlockSpec((None, H // s, W // s), lambda b: (b, 0, 0)) for s in (1, 2, 4, 8)
    )

    # Scoped-VMEM budget for the single-block-per-image design: double-buffered
    # input + the 4 output blocks + live intermediates, with headroom.
    per_image = H * W * 4
    vmem_limit = min(56 << 20, max(32 << 20, 12 * per_image + (2 << 20)))

    outs = pl.pallas_call(
        _pyramid_kernel,
        out_shape=out_shape,
        grid=(B,),
        in_specs=[pl.BlockSpec((None, H, W), lambda b: (b, 0, 0))],
        out_specs=out_specs,
        compiler_params=pltpu.CompilerParams(
            dimension_semantics=("parallel",),
            vmem_limit_bytes=vmem_limit,
        ),
    )(xb)
    return [o.reshape(lead + o.shape[1:]) for o in outs]


# ----------------------------------------------------------------------------
# Pure-JAX reference (unfused, step-by-step, for correctness check)
# ----------------------------------------------------------------------------
def _ref_pool(x):
    H, W = x.shape[-2:]
    pad = [(0, 0)] * (x.ndim - 2) + [(1, 1), (1, 1)]
    xp = jnp.pad(x, pad)
    acc = jnp.zeros_like(x)
    for di in range(3):
        for dj in range(3):
            acc = acc + xp[..., di:di + H, dj:dj + W]
    return acc / 9.0


def _ref_down2(x):
    H, W = x.shape[-2:]
    xr = x.reshape(*x.shape[:-2], H // 2, 2, W // 2, 2)
    return xr.mean(axis=(-3, -1))


def _ref_forward(x):
    t1 = _ref_pool(x)
    t2 = _ref_pool(_ref_down2(_ref_pool(t1)))
    t3 = _ref_pool(_ref_down2(_ref_pool(t2)))
    t4 = _ref_pool(_ref_down2(_ref_pool(_ref_pool(t3))))
    return [t1, t2, t3, t4]


if __name__ == "__main__":
    key = jax.random.PRNGKey(0)
    # The module processes 2-D images viewed as (1, 1, H, W); batch the N*C
    # images of an NCHW tensor through one launch via the grid's batch axis.
    N, C, H, W = 2, 4, 16, 16
    x = jax.random.normal(key, (N, C, H, W), dtype=jnp.float32)

    outs = convert_forward(x)
    outs = [jax.block_until_ready(o) for o in outs]

    refs = _ref_forward(x)
    for o, r in zip(outs, refs):
        assert o.shape == r.shape, (o.shape, r.shape)
        err = float(jnp.max(jnp.abs(o - r)))
        assert err < 2e-5, err

    print("KERNEL_OK")
</pallas_src>

<mosaic_0001>
module attributes {stable_mosaic.version = 11 : i64} {
  func.func @_pyramid_kernel(%arg0: i32, %arg1: memref<1x16x16xf32, #tpu.memory_space<vmem>>, %arg2: memref<1x16x16xf32, #tpu.memory_space<vmem>>, %arg3: memref<1x8x8xf32, #tpu.memory_space<vmem>>, %arg4: memref<1x4x4xf32, #tpu.memory_space<vmem>>, %arg5: memref<1x2x2xf32, #tpu.memory_space<vmem>>) attributes {dimension_semantics = [#tpu.dimension_semantics<parallel>], iteration_bounds = array<i64: 8>, scalar_prefetch = 0 : i64, scratch_operands = 0 : i64, tpu.core_type = #tpu.core_type<tc>, window_params = [{transform_indices = @transform_0, window_bounds = array<i64: 1, 16, 16>}, {transform_indices = @transform_1, window_bounds = array<i64: 1, 16, 16>}, {transform_indices = @transform_2, window_bounds = array<i64: 1, 8, 8>}, {transform_indices = @transform_3, window_bounds = array<i64: 1, 4, 4>}, {transform_indices = @transform_4, window_bounds = array<i64: 1, 2, 2>}]} {
    %c0 = arith.constant 0 : index
    %c0_0 = arith.constant 0 : index
    %c0_1 = arith.constant 0 : index
    %0 = vector.load %arg1[%c0, %c0_0, %c0_1] : memref<1x16x16xf32, #tpu.memory_space<vmem>>, vector<1x16x16xf32>
    %1 = vector.shape_cast %0 : vector<1x16x16xf32> to vector<16x16xf32>
    %2 = tpu.iota {dimensions = array<i32: 0>} : vector<16x16xi32>
    %3 = tpu.iota {dimensions = array<i32: 1>} : vector<16x16xi32>
    %c0_i32 = arith.constant 0 : i32
    %4 = vector.broadcast %c0_i32 : i32 to vector<16x16xi32>
    %5 = arith.cmpi eq, %2, %4 : vector<16x16xi32>
    %c1_i32 = arith.constant 1 : i32
    %6 = tpu.dynamic_rotate %1 by %c1_i32 dim 0 : vector<16x16xf32>, i32 -> vector<16x16xf32>
    %cst = arith.constant 0.000000e+00 : f32
    %7 = vector.broadcast %cst : f32 to vector<16x16xf32>
    %8 = arith.select %5, %7, %6 : vector<16x16xi1>, vector<16x16xf32>
    %c15_i32 = arith.constant 15 : i32
    %9 = vector.broadcast %c15_i32 : i32 to vector<16x16xi32>
    %10 = arith.cmpi eq, %2, %9 : vector<16x16xi32>
    %c15_i32_2 = arith.constant 15 : i32
    %11 = tpu.dynamic_rotate %1 by %c15_i32_2 dim 0 : vector<16x16xf32>, i32 -> vector<16x16xf32>
    %cst_3 = arith.constant 0.000000e+00 : f32
    %12 = vector.broadcast %cst_3 : f32 to vector<16x16xf32>
    %13 = arith.select %10, %12, %11 : vector<16x16xi1>, vector<16x16xf32>
    %14 = arith.addf %1, %8 : vector<16x16xf32>
    %15 = arith.addf %14, %13 : vector<16x16xf32>
    %c0_i32_4 = arith.constant 0 : i32
    %16 = vector.broadcast %c0_i32_4 : i32 to vector<16x16xi32>
    %17 = arith.cmpi eq, %3, %16 : vector<16x16xi32>
    %c1_i32_5 = arith.constant 1 : i32
    %18 = tpu.dynamic_rotate %15 by %c1_i32_5 dim 1 : vector<16x16xf32>, i32 -> vector<16x16xf32>
    %cst_6 = arith.constant 0.000000e+00 : f32
    %19 = vector.broadcast %cst_6 : f32 to vector<16x16xf32>
    %20 = arith.select %17, %19, %18 : vector<16x16xi1>, vector<16x16xf32>
    %c15_i32_7 = arith.constant 15 : i32
    %21 = vector.broadcast %c15_i32_7 : i32 to vector<16x16xi32>
    %22 = arith.cmpi eq, %3, %21 : vector<16x16xi32>
    %c15_i32_8 = arith.constant 15 : i32
    %23 = tpu.dynamic_rotate %15 by %c15_i32_8 dim 1 : vector<16x16xf32>, i32 -> vector<16x16xf32>
    %cst_9 = arith.constant 0.000000e+00 : f32
    %24 = vector.broadcast %cst_9 : f32 to vector<16x16xf32>
    %25 = arith.select %22, %24, %23 : vector<16x16xi1>, vector<16x16xf32>
    %26 = arith.addf %15, %20 : vector<16x16xf32>
    %27 = arith.addf %26, %25 : vector<16x16xf32>
    %cst_10 = arith.constant 0.111111112 : f32
    %28 = vector.broadcast %cst_10 : f32 to vector<16x16xf32>
    %29 = arith.mulf %27, %28 : vector<16x16xf32>
    %c0_11 = arith.constant 0 : index
    %c0_12 = arith.constant 0 : index
    %c0_13 = arith.constant 0 : index
    %30 = vector.load %arg2[%c0_11, %c0_12, %c0_13] : memref<1x16x16xf32, #tpu.memory_space<vmem>>, vector<1x16x16xf32>
    %31 = vector.shape_cast %30 : vector<1x16x16xf32> to vector<16x16xf32>
    %32 = vector.shape_cast %29 : vector<16x16xf32> to vector<1x16x16xf32>
    tpu.vector_store %arg2[%c0_11, %c0_12, %c0_13], %32 {strides = array<i32>} : memref<1x16x16xf32, #tpu.memory_space<vmem>>, vector<1x16x16xf32>,
    %c0_14 = arith.constant 0 : index
    %c0_15 = arith.constant 0 : index
    %c0_16 = arith.constant 0 : index
    %33 = vector.load %arg2[%c0_14, %c0_15, %c0_16] : memref<1x16x16xf32, #tpu.memory_space<vmem>>, vector<1x16x16xf32>
    %34 = vector.shape_cast %33 : vector<1x16x16xf32> to vector<16x16xf32>
    %35 = tpu.iota {dimensions = array<i32: 0>} : vector<8x16xi32>
    %36 = tpu.iota {dimensions = array<i32: 1>} : vector<8x16xi32>
    %c2_i32 = arith.constant 2 : i32
    %37 = vector.broadcast %c2_i32 : i32 to vector<8x16xi32>
    %38 = arith.muli %37, %35 : vector<8x16xi32>
    %39 = arith.subi %36, %38 : vector<8x16xi32>
    %c1_i32_17 = arith.constant 1 : i32
    %40 = vector.broadcast %c1_i32_17 : i32 to vector<8x16xi32>
    %41 = arith.addi %39, %40 : vector<8x16xi32>
    %c0_i32_18 = arith.constant 0 : i32
    %42 = vector.broadcast %c0_i32_18 : i32 to vector<8x16xi32>
    %43 = arith.cmpi eq, %41, %42 : vector<8x16xi32>
    %c3_i32 = arith.constant 3 : i32
    %44 = vector.broadcast %c3_i32 : i32 to vector<8x16xi32>
    %45 = arith.cmpi eq, %41, %44 : vector<8x16xi32>
    %46 = arith.ori %43, %45 : vector<8x16xi1>
    %cst_19 = arith.constant 1.000000e+00 : f32
    %cst_20 = arith.constant 0.000000e+00 : f32
    %47 = vector.broadcast %cst_19 : f32 to vector<8x16xf32>
    %48 = vector.broadcast %cst_20 : f32 to vector<8x16xf32>
    %49 = arith.select %46, %47, %48 : vector<8x16xi1>, vector<8x16xf32>
    %c1_i32_21 = arith.constant 1 : i32
    %50 = vector.broadcast %c1_i32_21 : i32 to vector<8x16xi32>
    %51 = arith.cmpi eq, %41, %50 : vector<8x16xi32>
    %c2_i32_22 = arith.constant 2 : i32
    %52 = vector.broadcast %c2_i32_22 : i32 to vector<8x16xi32>
    %53 = arith.cmpi eq, %41, %52 : vector<8x16xi32>
    %54 = arith.ori %51, %53 : vector<8x16xi1>
    %cst_23 = arith.constant 2.000000e+00 : f32
    %cst_24 = arith.constant 0.000000e+00 : f32
    %55 = vector.broadcast %cst_23 : f32 to vector<8x16xf32>
    %56 = vector.broadcast %cst_24 : f32 to vector<8x16xf32>
    %57 = arith.select %54, %55, %56 : vector<8x16xi1>, vector<8x16xf32>
    %58 = arith.addf %49, %57 : vector<8x16xf32>
    %cst_25 = arith.constant 0.166666672 : f32
    %59 = vector.broadcast %cst_25 : f32 to vector<8x16xf32>
    %60 = arith.mulf %58, %59 : vector<8x16xf32>
    %61 = tpu.iota {dimensions = array<i32: 0>} : vector<16x8xi32>
    %62 = tpu.iota {dimensions = array<i32: 1>} : vector<16x8xi32>
    %c2_i32_26 = arith.constant 2 : i32
    %63 = vector.broadcast %c2_i32_26 : i32 to vector<16x8xi32>
    %64 = arith.muli %63, %62 : vector<16x8xi32>
    %65 = arith.subi %61, %64 : vector<16x8xi32>
    %c1_i32_27 = arith.constant 1 : i32
    %66 = vector.broadcast %c1_i32_27 : i32 to vector<16x8xi32>
    %67 = arith.addi %65, %66 : vector<16x8xi32>
    %c0_i32_28 = arith.constant 0 : i32
    %68 = vector.broadcast %c0_i32_28 : i32 to vector<16x8xi32>
    %69 = arith.cmpi eq, %67, %68 : vector<16x8xi32>
    %c3_i32_29 = arith.constant 3 : i32
    %70 = vector.broadcast %c3_i32_29 : i32 to vector<16x8xi32>
    %71 = arith.cmpi eq, %67, %70 : vector<16x8xi32>
    %72 = arith.ori %69, %71 : vector<16x8xi1>
    %cst_30 = arith.constant 1.000000e+00 : f32
    %cst_31 = arith.constant 0.000000e+00 : f32
    %73 = vector.broadcast %cst_30 : f32 to vector<16x8xf32>
    %74 = vector.broadcast %cst_31 : f32 to vector<16x8xf32>
    %75 = arith.select %72, %73, %74 : vector<16x8xi1>, vector<16x8xf32>
    %c1_i32_32 = arith.constant 1 : i32
    %76 = vector.broadcast %c1_i32_32 : i32 to vector<16x8xi32>
    %77 = arith.cmpi eq, %67, %76 : vector<16x8xi32>
    %c2_i32_33 = arith.constant 2 : i32
    %78 = vector.broadcast %c2_i32_33 : i32 to vector<16x8xi32>
    %79 = arith.cmpi eq, %67, %78 : vector<16x8xi32>
    %80 = arith.ori %77, %79 : vector<16x8xi1>
    %cst_34 = arith.constant 2.000000e+00 : f32
    %cst_35 = arith.constant 0.000000e+00 : f32
    %81 = vector.broadcast %cst_34 : f32 to vector<16x8xf32>
    %82 = vector.broadcast %cst_35 : f32 to vector<16x8xf32>
    %83 = arith.select %80, %81, %82 : vector<16x8xi1>, vector<16x8xf32>
    %84 = arith.addf %75, %83 : vector<16x8xf32>
    %cst_36 = arith.constant 0.166666672 : f32
    %85 = vector.broadcast %cst_36 : f32 to vector<16x8xf32>
    %86 = arith.mulf %84, %85 : vector<16x8xf32>
    %cst_37 = arith.constant dense<0.000000e+00> : vector<8x16xf32>
    %87 = tpu.matmul %60, %34, %cst_37 {dimension_numbers = #tpu.dot_dimension_numbers<[1], [0], [0], [1], [0, 0, 1, 1], [], []>} : vector<8x16xf32>, vector<16x16xf32>, vector<8x16xf32> -> vector<8x16xf32>
    %cst_38 = arith.constant dense<0.000000e+00> : vector<8x8xf32>
    %88 = tpu.matmul %87, %86, %cst_38 {dimension_numbers = #tpu.dot_dimension_numbers<[1], [0], [0], [1], [0, 0, 1, 1], [], []>} : vector<8x16xf32>, vector<16x8xf32>, vector<8x8xf32> -> vector<8x8xf32>
    %89 = tpu.iota {dimensions = array<i32: 0>} : vector<8x8xi32>
    %90 = tpu.iota {dimensions = array<i32: 1>} : vector<8x8xi32>
    %c0_i32_39 = arith.constant 0 : i32
    %91 = vector.broadcast %c0_i32_39 : i32 to vector<8x8xi32>
    %92 = arith.cmpi eq, %89, %91 : vector<8x8xi32>
    %c1_i32_40 = arith.constant 1 : i32
    %93 = tpu.dynamic_rotate %88 by %c1_i32_40 dim 0 : vector<8x8xf32>, i32 -> vector<8x8xf32>
    %cst_41 = arith.constant 0.000000e+00 : f32
    %94 = vector.broadcast %cst_41 : f32 to vector<8x8xf32>
    %95 = arith.select %92, %94, %93 : vector<8x8xi1>, vector<8x8xf32>
    %c7_i32 = arith.constant 7 : i32
    %96 = vector.broadcast %c7_i32 : i32 to vector<8x8xi32>
    %97 = arith.cmpi eq, %89, %96 : vector<8x8xi32>
    %c7_i32_42 = arith.constant 7 : i32
    %98 = tpu.dynamic_rotate %88 by %c7_i32_42 dim 0 : vector<8x8xf32>, i32 -> vector<8x8xf32>
    %cst_43 = arith.constant 0.000000e+00 : f32
    %99 = vector.broadcast %cst_43 : f32 to vector<8x8xf32>
    %100 = arith.select %97, %99, %98 : vector<8x8xi1>, vector<8x8xf32>
    %101 = arith.addf %88, %95 : vector<8x8xf32>
    %102 = arith.addf %101, %100 : vector<8x8xf32>
    %c0_i32_44 = arith.constant 0 : i32
    %103 = vector.broadcast %c0_i32_44 : i32 to vector<8x8xi32>
    %104 = arith.cmpi eq, %90, %103 : vector<8x8xi32>
    %c1_i32_45 = arith.constant 1 : i32
    %105 = tpu.dynamic_rotate %102 by %c1_i32_45 dim 1 : vector<8x8xf32>, i32 -> vector<8x8xf32>
    %cst_46 = arith.constant 0.000000e+00 : f32
    %106 = vector.broadcast %cst_46 : f32 to vector<8x8xf32>
    %107 = arith.select %104, %106, %105 : vector<8x8xi1>, vector<8x8xf32>
    %c7_i32_47 = arith.constant 7 : i32
    %108 = vector.broadcast %c7_i32_47 : i32 to vector<8x8xi32>
    %109 = arith.cmpi eq, %90, %108 : vector<8x8xi32>
    %c7_i32_48 = arith.constant 7 : i32
    %110 = tpu.dynamic_rotate %102 by %c7_i32_48 dim 1 : vector<8x8xf32>, i32 -> vector<8x8xf32>
    %cst_49 = arith.constant 0.000000e+00 : f32
    %111 = vector.broadcast %cst_49 : f32 to vector<8x8xf32>
    %112 = arith.select %109, %111, %110 : vector<8x8xi1>, vector<8x8xf32>
    %113 = arith.addf %102, %107 : vector<8x8xf32>
    %114 = arith.addf %113, %112 : vector<8x8xf32>
    %cst_50 = arith.constant 0.111111112 : f32
    %115 = vector.broadcast %cst_50 : f32 to vector<8x8xf32>
    %116 = arith.mulf %114, %115 : vector<8x8xf32>
    %c0_51 = arith.constant 0 : index
    %c0_52 = arith.constant 0 : index
    %c0_53 = arith.constant 0 : index
    %117 = vector.load %arg3[%c0_51, %c0_52, %c0_53] : memref<1x8x8xf32, #tpu.memory_space<vmem>>, vector<1x8x8xf32>
    %118 = vector.shape_cast %117 : vector<1x8x8xf32> to vector<8x8xf32>
    %119 = vector.shape_cast %116 : vector<8x8xf32> to vector<1x8x8xf32>
    tpu.vector_store %arg3[%c0_51, %c0_52, %c0_53], %119 {strides = array<i32>} : memref<1x8x8xf32, #tpu.memory_space<vmem>>, vector<1x8x8xf32>,
    %c0_54 = arith.constant 0 : index
    %c0_55 = arith.constant 0 : index
    %c0_56 = arith.constant 0 : index
    %120 = vector.load %arg3[%c0_54, %c0_55, %c0_56] : memref<1x8x8xf32, #tpu.memory_space<vmem>>, vector<1x8x8xf32>
    %121 = vector.shape_cast %120 : vector<1x8x8xf32> to vector<8x8xf32>
    %122 = tpu.iota {dimensions = array<i32: 0>} : vector<4x8xi32>
    %123 = tpu.iota {dimensions = array<i32: 1>} : vector<4x8xi32>
    %c2_i32_57 = arith.constant 2 : i32
    %124 = vector.broadcast %c2_i32_57 : i32 to vector<4x8xi32>
    %125 = arith.muli %124, %122 : vector<4x8xi32>
    %126 = arith.subi %123, %125 : vector<4x8xi32>
    %c1_i32_58 = arith.constant 1 : i32
    %127 = vector.broadcast %c1_i32_58 : i32 to vector<4x8xi32>
    %128 = arith.addi %126, %127 : vector<4x8xi32>
    %c0_i32_59 = arith.constant 0 : i32
    %129 = vector.broadcast %c0_i32_59 : i32 to vector<4x8xi32>
    %130 = arith.cmpi eq, %128, %129 : vector<4x8xi32>
    %c3_i32_60 = arith.constant 3 : i32
    %131 = vector.broadcast %c3_i32_60 : i32 to vector<4x8xi32>
    %132 = arith.cmpi eq, %128, %131 : vector<4x8xi32>
    %133 = arith.ori %130, %132 : vector<4x8xi1>
    %cst_61 = arith.constant 1.000000e+00 : f32
    %cst_62 = arith.constant 0.000000e+00 : f32
    %134 = vector.broadcast %cst_61 : f32 to vector<4x8xf32>
    %135 = vector.broadcast %cst_62 : f32 to vector<4x8xf32>
    %136 = arith.select %133, %134, %135 : vector<4x8xi1>, vector<4x8xf32>
    %c1_i32_63 = arith.constant 1 : i32
    %137 = vector.broadcast %c1_i32_63 : i32 to vector<4x8xi32>
    %138 = arith.cmpi eq, %128, %137 : vector<4x8xi32>
    %c2_i32_64 = arith.constant 2 : i32
    %139 = vector.broadcast %c2_i32_64 : i32 to vector<4x8xi32>
    %140 = arith.cmpi eq, %128, %139 : vector<4x8xi32>
    %141 = arith.ori %138, %140 : vector<4x8xi1>
    %cst_65 = arith.constant 2.000000e+00 : f32
    %cst_66 = arith.constant 0.000000e+00 : f32
    %142 = vector.broadcast %cst_65 : f32 to vector<4x8xf32>
    %143 = vector.broadcast %cst_66 : f32 to vector<4x8xf32>
    %144 = arith.select %141, %142, %143 : vector<4x8xi1>, vector<4x8xf32>
    %145 = arith.addf %136, %144 : vector<4x8xf32>
    %cst_67 = arith.constant 0.166666672 : f32
    %146 = vector.broadcast %cst_67 : f32 to vector<4x8xf32>
    %147 = arith.mulf %145, %146 : vector<4x8xf32>
    %148 = tpu.iota {dimensions = array<i32: 0>} : vector<8x4xi32>
    %149 = tpu.iota {dimensions = array<i32: 1>} : vector<8x4xi32>
    %c2_i32_68 = arith.constant 2 : i32
    %150 = vector.broadcast %c2_i32_68 : i32 to vector<8x4xi32>
    %151 = arith.muli %150, %149 : vector<8x4xi32>
    %152 = arith.subi %148, %151 : vector<8x4xi32>
    %c1_i32_69 = arith.constant 1 : i32
    %153 = vector.broadcast %c1_i32_69 : i32 to vector<8x4xi32>
    %154 = arith.addi %152, %153 : vector<8x4xi32>
    %c0_i32_70 = arith.constant 0 : i32
    %155 = vector.broadcast %c0_i32_70 : i32 to vector<8x4xi32>
    %156 = arith.cmpi eq, %154, %155 : vector<8x4xi32>
    %c3_i32_71 = arith.constant 3 : i32
    %157 = vector.broadcast %c3_i32_71 : i32 to vector<8x4xi32>
    %158 = arith.cmpi eq, %154, %157 : vector<8x4xi32>
    %159 = arith.ori %156, %158 : vector<8x4xi1>
    %cst_72 = arith.constant 1.000000e+00 : f32
    %cst_73 = arith.constant 0.000000e+00 : f32
    %160 = vector.broadcast %cst_72 : f32 to vector<8x4xf32>
    %161 = vector.broadcast %cst_73 : f32 to vector<8x4xf32>
    %162 = arith.select %159, %160, %161 : vector<8x4xi1>, vector<8x4xf32>
    %c1_i32_74 = arith.constant 1 : i32
    %163 = vector.broadcast %c1_i32_74 : i32 to vector<8x4xi32>
    %164 = arith.cmpi eq, %154, %163 : vector<8x4xi32>
    %c2_i32_75 = arith.constant 2 : i32
    %165 = vector.broadcast %c2_i32_75 : i32 to vector<8x4xi32>
    %166 = arith.cmpi eq, %154, %165 : vector<8x4xi32>
    %167 = arith.ori %164, %166 : vector<8x4xi1>
    %cst_76 = arith.constant 2.000000e+00 : f32
    %cst_77 = arith.constant 0.000000e+00 : f32
    %168 = vector.broadcast %cst_76 : f32 to vector<8x4xf32>
    %169 = vector.broadcast %cst_77 : f32 to vector<8x4xf32>
    %170 = arith.select %167, %168, %169 : vector<8x4xi1>, vector<8x4xf32>
    %171 = arith.addf %162, %170 : vector<8x4xf32>
    %cst_78 = arith.constant 0.166666672 : f32
    %172 = vector.broadcast %cst_78 : f32 to vector<8x4xf32>
    %173 = arith.mulf %171, %172 : vector<8x4xf32>
    %cst_79 = arith.constant dense<0.000000e+00> : vector<4x8xf32>
    %174 = tpu.matmul %147, %121, %cst_79 {dimension_numbers = #tpu.dot_dimension_numbers<[1], [0], [0], [1], [0, 0, 1, 1], [], []>} : vector<4x8xf32>, vector<8x8xf32>, vector<4x8xf32> -> vector<4x8xf32>
    %cst_80 = arith.constant dense<0.000000e+00> : vector<4x4xf32>
    %175 = tpu.matmul %174, %173, %cst_80 {dimension_numbers = #tpu.dot_dimension_numbers<[1], [0], [0], [1], [0, 0, 1, 1], [], []>} : vector<4x8xf32>, vector<8x4xf32>, vector<4x4xf32> -> vector<4x4xf32>
    %176 = tpu.iota {dimensions = array<i32: 0>} : vector<4x4xi32>
    %177 = tpu.iota {dimensions = array<i32: 1>} : vector<4x4xi32>
    %c0_i32_81 = arith.constant 0 : i32
    %178 = vector.broadcast %c0_i32_81 : i32 to vector<4x4xi32>
    %179 = arith.cmpi eq, %176, %178 : vector<4x4xi32>
    %c1_i32_82 = arith.constant 1 : i32
    %180 = tpu.dynamic_rotate %175 by %c1_i32_82 dim 0 : vector<4x4xf32>, i32 -> vector<4x4xf32>
    %cst_83 = arith.constant 0.000000e+00 : f32
    %181 = vector.broadcast %cst_83 : f32 to vector<4x4xf32>
    %182 = arith.select %179, %181, %180 : vector<4x4xi1>, vector<4x4xf32>
    %c3_i32_84 = arith.constant 3 : i32
    %183 = vector.broadcast %c3_i32_84 : i32 to vector<4x4xi32>
    %184 = arith.cmpi eq, %176, %183 : vector<4x4xi32>
    %c3_i32_85 = arith.constant 3 : i32
    %185 = tpu.dynamic_rotate %175 by %c3_i32_85 dim 0 : vector<4x4xf32>, i32 -> vector<4x4xf32>
    %cst_86 = arith.constant 0.000000e+00 : f32
    %186 = vector.broadcast %cst_86 : f32 to vector<4x4xf32>
    %187 = arith.select %184, %186, %185 : vector<4x4xi1>, vector<4x4xf32>
    %188 = arith.addf %175, %182 : vector<4x4xf32>
    %189 = arith.addf %188, %187 : vector<4x4xf32>
    %c0_i32_87 = arith.constant 0 : i32
    %190 = vector.broadcast %c0_i32_87 : i32 to vector<4x4xi32>
    %191 = arith.cmpi eq, %177, %190 : vector<4x4xi32>
    %c1_i32_88 = arith.constant 1 : i32
    %192 = tpu.dynamic_rotate %189 by %c1_i32_88 dim 1 : vector<4x4xf32>, i32 -> vector<4x4xf32>
    %cst_89 = arith.constant 0.000000e+00 : f32
    %193 = vector.broadcast %cst_89 : f32 to vector<4x4xf32>
    %194 = arith.select %191, %193, %192 : vector<4x4xi1>, vector<4x4xf32>
    %c3_i32_90 = arith.constant 3 : i32
    %195 = vector.broadcast %c3_i32_90 : i32 to vector<4x4xi32>
    %196 = arith.cmpi eq, %177, %195 : vector<4x4xi32>
    %c3_i32_91 = arith.constant 3 : i32
    %197 = tpu.dynamic_rotate %189 by %c3_i32_91 dim 1 : vector<4x4xf32>, i32 -> vector<4x4xf32>
    %cst_92 = arith.constant 0.000000e+00 : f32
    %198 = vector.broadcast %cst_92 : f32 to vector<4x4xf32>
    %199 = arith.select %196, %198, %197 : vector<4x4xi1>, vector<4x4xf32>
    %200 = arith.addf %189, %194 : vector<4x4xf32>
    %201 = arith.addf %200, %199 : vector<4x4xf32>
    %cst_93 = arith.constant 0.111111112 : f32
    %202 = vector.broadcast %cst_93 : f32 to vector<4x4xf32>
    %203 = arith.mulf %201, %202 : vector<4x4xf32>
    %c0_94 = arith.constant 0 : index
    %c0_95 = arith.constant 0 : index
    %c0_96 = arith.constant 0 : index
    %204 = vector.load %arg4[%c0_94, %c0_95, %c0_96] : memref<1x4x4xf32, #tpu.memory_space<vmem>>, vector<1x4x4xf32>
    %205 = vector.shape_cast %204 : vector<1x4x4xf32> to vector<4x4xf32>
    %206 = vector.shape_cast %203 : vector<4x4xf32> to vector<1x4x4xf32>
    tpu.vector_store %arg4[%c0_94, %c0_95, %c0_96], %206 {strides = array<i32>} : memref<1x4x4xf32, #tpu.memory_space<vmem>>, vector<1x4x4xf32>,
    %c0_97 = arith.constant 0 : index
    %c0_98 = arith.constant 0 : index
    %c0_99 = arith.constant 0 : index
    %207 = vector.load %arg4[%c0_97, %c0_98, %c0_99] : memref<1x4x4xf32, #tpu.memory_space<vmem>>, vector<1x4x4xf32>
    %208 = vector.shape_cast %207 : vector<1x4x4xf32> to vector<4x4xf32>
    %209 = tpu.iota {dimensions = array<i32: 0>} : vector<4x4xi32>
    %210 = tpu.iota {dimensions = array<i32: 1>} : vector<4x4xi32>
    %c0_i32_100 = arith.constant 0 : i32
    %211 = vector.broadcast %c0_i32_100 : i32 to vector<4x4xi32>
    %212 = arith.cmpi eq, %209, %211 : vector<4x4xi32>
    %c1_i32_101 = arith.constant 1 : i32
    %213 = tpu.dynamic_rotate %208 by %c1_i32_101 dim 0 : vector<4x4xf32>, i32 -> vector<4x4xf32>
    %cst_102 = arith.constant 0.000000e+00 : f32
    %214 = vector.broadcast %cst_102 : f32 to vector<4x4xf32>
    %215 = arith.select %212, %214, %213 : vector<4x4xi1>, vector<4x4xf32>
    %c3_i32_103 = arith.constant 3 : i32
    %216 = vector.broadcast %c3_i32_103 : i32 to vector<4x4xi32>
    %217 = arith.cmpi eq, %209, %216 : vector<4x4xi32>
    %c3_i32_104 = arith.constant 3 : i32
    %218 = tpu.dynamic_rotate %208 by %c3_i32_104 dim 0 : vector<4x4xf32>, i32 -> vector<4x4xf32>
    %cst_105 = arith.constant 0.000000e+00 : f32
    %219 = vector.broadcast %cst_105 : f32 to vector<4x4xf32>
    %220 = arith.select %217, %219, %218 : vector<4x4xi1>, vector<4x4xf32>
    %221 = arith.addf %208, %215 : vector<4x4xf32>
    %222 = arith.addf %221, %220 : vector<4x4xf32>
    %c0_i32_106 = arith.constant 0 : i32
    %223 = vector.broadcast %c0_i32_106 : i32 to vector<4x4xi32>
    %224 = arith.cmpi eq, %210, %223 : vector<4x4xi32>
    %c1_i32_107 = arith.constant 1 : i32
    %225 = tpu.dynamic_rotate %222 by %c1_i32_107 dim 1 : vector<4x4xf32>, i32 -> vector<4x4xf32>
    %cst_108 = arith.constant 0.000000e+00 : f32
    %226 = vector.broadcast %cst_108 : f32 to vector<4x4xf32>
    %227 = arith.select %224, %226, %225 : vector<4x4xi1>, vector<4x4xf32>
    %c3_i32_109 = arith.constant 3 : i32
    %228 = vector.broadcast %c3_i32_109 : i32 to vector<4x4xi32>
    %229 = arith.cmpi eq, %210, %228 : vector<4x4xi32>
    %c3_i32_110 = arith.constant 3 : i32
    %230 = tpu.dynamic_rotate %222 by %c3_i32_110 dim 1 : vector<4x4xf32>, i32 -> vector<4x4xf32>
    %cst_111 = arith.constant 0.000000e+00 : f32
    %231 = vector.broadcast %cst_111 : f32 to vector<4x4xf32>
    %232 = arith.select %229, %231, %230 : vector<4x4xi1>, vector<4x4xf32>
    %233 = arith.addf %222, %227 : vector<4x4xf32>
    %234 = arith.addf %233, %232 : vector<4x4xf32>
    %cst_112 = arith.constant 0.111111112 : f32
    %235 = vector.broadcast %cst_112 : f32 to vector<4x4xf32>
    %236 = arith.mulf %234, %235 : vector<4x4xf32>
    %237 = tpu.iota {dimensions = array<i32: 0>} : vector<2x4xi32>
    %238 = tpu.iota {dimensions = array<i32: 1>} : vector<2x4xi32>
    %c2_i32_113 = arith.constant 2 : i32
    %239 = vector.broadcast %c2_i32_113 : i32 to vector<2x4xi32>
    %240 = arith.muli %239, %237 : vector<2x4xi32>
    %241 = arith.subi %238, %240 : vector<2x4xi32>
    %c1_i32_114 = arith.constant 1 : i32
    %242 = vector.broadcast %c1_i32_114 : i32 to vector<2x4xi32>
    %243 = arith.addi %241, %242 : vector<2x4xi32>
    %c0_i32_115 = arith.constant 0 : i32
    %244 = vector.broadcast %c0_i32_115 : i32 to vector<2x4xi32>
    %245 = arith.cmpi eq, %243, %244 : vector<2x4xi32>
    %c3_i32_116 = arith.constant 3 : i32
    %246 = vector.broadcast %c3_i32_116 : i32 to vector<2x4xi32>
    %247 = arith.cmpi eq, %243, %246 : vector<2x4xi32>
    %248 = arith.ori %245, %247 : vector<2x4xi1>
    %cst_117 = arith.constant 1.000000e+00 : f32
    %cst_118 = arith.constant 0.000000e+00 : f32
    %249 = vector.broadcast %cst_117 : f32 to vector<2x4xf32>
    %250 = vector.broadcast %cst_118 : f32 to vector<2x4xf32>
    %251 = arith.select %248, %249, %250 : vector<2x4xi1>, vector<2x4xf32>
    %c1_i32_119 = arith.constant 1 : i32
    %252 = vector.broadcast %c1_i32_119 : i32 to vector<2x4xi32>
    %253 = arith.cmpi eq, %243, %252 : vector<2x4xi32>
    %c2_i32_120 = arith.constant 2 : i32
    %254 = vector.broadcast %c2_i32_120 : i32 to vector<2x4xi32>
    %255 = arith.cmpi eq, %243, %254 : vector<2x4xi32>
    %256 = arith.ori %253, %255 : vector<2x4xi1>
    %cst_121 = arith.constant 2.000000e+00 : f32
    %cst_122 = arith.constant 0.000000e+00 : f32
    %257 = vector.broadcast %cst_121 : f32 to vector<2x4xf32>
    %258 = vector.broadcast %cst_122 : f32 to vector<2x4xf32>
    %259 = arith.select %256, %257, %258 : vector<2x4xi1>, vector<2x4xf32>
    %260 = arith.addf %251, %259 : vector<2x4xf32>
    %cst_123 = arith.constant 0.166666672 : f32
    %261 = vector.broadcast %cst_123 : f32 to vector<2x4xf32>
    %262 = arith.mulf %260, %261 : vector<2x4xf32>
    %263 = tpu.iota {dimensions = array<i32: 0>} : vector<4x2xi32>
    %264 = tpu.iota {dimensions = array<i32: 1>} : vector<4x2xi32>
    %c2_i32_124 = arith.constant 2 : i32
    %265 = vector.broadcast %c2_i32_124 : i32 to vector<4x2xi32>
    %266 = arith.muli %265, %264 : vector<4x2xi32>
    %267 = arith.subi %263, %266 : vector<4x2xi32>
    %c1_i32_125 = arith.constant 1 : i32
    %268 = vector.broadcast %c1_i32_125 : i32 to vector<4x2xi32>
    %269 = arith.addi %267, %268 : vector<4x2xi32>
    %c0_i32_126 = arith.constant 0 : i32
    %270 = vector.broadcast %c0_i32_126 : i32 to vector<4x2xi32>
    %271 = arith.cmpi eq, %269, %270 : vector<4x2xi32>
    %c3_i32_127 = arith.constant 3 : i32
    %272 = vector.broadcast %c3_i32_127 : i32 to vector<4x2xi32>
    %273 = arith.cmpi eq, %269, %272 : vector<4x2xi32>
    %274 = arith.ori %271, %273 : vector<4x2xi1>
    %cst_128 = arith.constant 1.000000e+00 : f32
    %cst_129 = arith.constant 0.000000e+00 : f32
    %275 = vector.broadcast %cst_128 : f32 to vector<4x2xf32>
    %276 = vector.broadcast %cst_129 : f32 to vector<4x2xf32>
    %277 = arith.select %274, %275, %276 : vector<4x2xi1>, vector<4x2xf32>
    %c1_i32_130 = arith.constant 1 : i32
    %278 = vector.broadcast %c1_i32_130 : i32 to vector<4x2xi32>
    %279 = arith.cmpi eq, %269, %278 : vector<4x2xi32>
    %c2_i32_131 = arith.constant 2 : i32
    %280 = vector.broadcast %c2_i32_131 : i32 to vector<4x2xi32>
    %281 = arith.cmpi eq, %269, %280 : vector<4x2xi32>
    %282 = arith.ori %279, %281 : vector<4x2xi1>
    %cst_132 = arith.constant 2.000000e+00 : f32
    %cst_133 = arith.constant 0.000000e+00 : f32
    %283 = vector.broadcast %cst_132 : f32 to vector<4x2xf32>
    %284 = vector.broadcast %cst_133 : f32 to vector<4x2xf32>
    %285 = arith.select %282, %283, %284 : vector<4x2xi1>, vector<4x2xf32>
    %286 = arith.addf %277, %285 : vector<4x2xf32>
    %cst_134 = arith.constant 0.166666672 : f32
    %287 = vector.broadcast %cst_134 : f32 to vector<4x2xf32>
    %288 = arith.mulf %286, %287 : vector<4x2xf32>
    %cst_135 = arith.constant dense<0.000000e+00> : vector<2x4xf32>
    %289 = tpu.matmul %262, %236, %cst_135 {dimension_numbers = #tpu.dot_dimension_numbers<[1], [0], [0], [1], [0, 0, 1, 1], [], []>} : vector<2x4xf32>, vector<4x4xf32>, vector<2x4xf32> -> vector<2x4xf32>
    %cst_136 = arith.constant dense<0.000000e+00> : vector<2x2xf32>
    %290 = tpu.matmul %289, %288, %cst_136 {dimension_numbers = #tpu.dot_dimension_numbers<[1], [0], [0], [1], [0, 0, 1, 1], [], []>} : vector<2x4xf32>, vector<4x2xf32>, vector<2x2xf32> -> vector<2x2xf32>
    %291 = tpu.iota {dimensions = array<i32: 0>} : vector<2x2xi32>
    %292 = tpu.iota {dimensions = array<i32: 1>} : vector<2x2xi32>
    %c0_i32_137 = arith.constant 0 : i32
    %293 = vector.broadcast %c0_i32_137 : i32 to vector<2x2xi32>
    %294 = arith.cmpi eq, %291, %293 : vector<2x2xi32>
    %c1_i32_138 = arith.constant 1 : i32
    %295 = tpu.dynamic_rotate %290 by %c1_i32_138 dim 0 : vector<2x2xf32>, i32 -> vector<2x2xf32>
    %cst_139 = arith.constant 0.000000e+00 : f32
    %296 = vector.broadcast %cst_139 : f32 to vector<2x2xf32>
    %297 = arith.select %294, %296, %295 : vector<2x2xi1>, vector<2x2xf32>
    %c1_i32_140 = arith.constant 1 : i32
    %298 = vector.broadcast %c1_i32_140 : i32 to vector<2x2xi32>
    %299 = arith.cmpi eq, %291, %298 : vector<2x2xi32>
    %c1_i32_141 = arith.constant 1 : i32
    %300 = tpu.dynamic_rotate %290 by %c1_i32_141 dim 0 : vector<2x2xf32>, i32 -> vector<2x2xf32>
    %cst_142 = arith.constant 0.000000e+00 : f32
    %301 = vector.broadcast %cst_142 : f32 to vector<2x2xf32>
    %302 = arith.select %299, %301, %300 : vector<2x2xi1>, vector<2x2xf32>
    %303 = arith.addf %290, %297 : vector<2x2xf32>
    %304 = arith.addf %303, %302 : vector<2x2xf32>
    %c0_i32_143 = arith.constant 0 : i32
    %305 = vector.broadcast %c0_i32_143 : i32 to vector<2x2xi32>
    %306 = arith.cmpi eq, %292, %305 : vector<2x2xi32>
    %c1_i32_144 = arith.constant 1 : i32
    %307 = tpu.dynamic_rotate %304 by %c1_i32_144 dim 1 : vector<2x2xf32>, i32 -> vector<2x2xf32>
    %cst_145 = arith.constant 0.000000e+00 : f32
    %308 = vector.broadcast %cst_145 : f32 to vector<2x2xf32>
    %309 = arith.select %306, %308, %307 : vector<2x2xi1>, vector<2x2xf32>
    %c1_i32_146 = arith.constant 1 : i32
    %310 = vector.broadcast %c1_i32_146 : i32 to vector<2x2xi32>
    %311 = arith.cmpi eq, %292, %310 : vector<2x2xi32>
    %c1_i32_147 = arith.constant 1 : i32
    %312 = tpu.dynamic_rotate %304 by %c1_i32_147 dim 1 : vector<2x2xf32>, i32 -> vector<2x2xf32>
    %cst_148 = arith.constant 0.000000e+00 : f32
    %313 = vector.broadcast %cst_148 : f32 to vector<2x2xf32>
    %314 = arith.select %311, %313, %312 : vector<2x2xi1>, vector<2x2xf32>
    %315 = arith.addf %304, %309 : vector<2x2xf32>
    %316 = arith.addf %315, %314 : vector<2x2xf32>
    %cst_149 = arith.constant 0.111111112 : f32
    %317 = vector.broadcast %cst_149 : f32 to vector<2x2xf32>
    %318 = arith.mulf %316, %317 : vector<2x2xf32>
    %c0_150 = arith.constant 0 : index
    %c0_151 = arith.constant 0 : index
    %c0_152 = arith.constant 0 : index
    %319 = vector.load %arg5[%c0_150, %c0_151, %c0_152] : memref<1x2x2xf32, #tpu.memory_space<vmem>>, vector<1x2x2xf32>
    %320 = vector.shape_cast %319 : vector<1x2x2xf32> to vector<2x2xf32>
    %321 = vector.shape_cast %318 : vector<2x2xf32> to vector<1x2x2xf32>
    tpu.vector_store %arg5[%c0_150, %c0_151, %c0_152], %321 {strides = array<i32>} : memref<1x2x2xf32, #tpu.memory_space<vmem>>, vector<1x2x2xf32>,
    return
  }
  func.func @transform_0(%arg0: i32) -> (i32, i32, i32) {
    %c0_i32 = arith.constant 0 : i32
    %c0_i32_0 = arith.constant 0 : i32
    %c0_i32_1 = arith.constant 0 : i32
    return %arg0, %c0_i32, %c0_i32_0 : i32, i32, i32
  }
  func.func @transform_1(%arg0: i32) -> (i32, i32, i32) {
    %c0_i32 = arith.constant 0 : i32
    %c0_i32_0 = arith.constant 0 : i32
    %c0_i32_1 = arith.constant 0 : i32
    return %arg0, %c0_i32, %c0_i32_0 : i32, i32, i32
  }
  func.func @transform_2(%arg0: i32) -> (i32, i32, i32) {
    %c0_i32 = arith.constant 0 : i32
    %c0_i32_0 = arith.constant 0 : i32
    %c0_i32_1 = arith.constant 0 : i32
    return %arg0, %c0_i32, %c0_i32_0 : i32, i32, i32
  }
  func.func @transform_3(%arg0: i32) -> (i32, i32, i32) {
    %c0_i32 = arith.constant 0 : i32
    %c0_i32_0 = arith.constant 0 : i32
    %c0_i32_1 = arith.constant 0 : i32
    return %arg0, %c0_i32, %c0_i32_0 : i32, i32, i32
  }
  func.func @transform_4(%arg0: i32) -> (i32, i32, i32) {
    %c0_i32 = arith.constant 0 : i32
    %c0_i32_0 = arith.constant 0 : i32
    %c0_i32_1 = arith.constant 0 : i32
    return %arg0, %c0_i32, %c0_i32_0 : i32, i32, i32
  }
}

</mosaic_0001>

<llo_original>
// kernel: tpu_custom_call.1
$region0: #{tpu_custom_call.1}
  #allocation0 [shape = 'u32[]', space=smem, size = 0x4, offset = 0x4, fixed_abs, tag = 'smem constant byte address 0x4 - core index']
  #allocation1 [shape = 'u32[144,128]{1,0:T(1,128)}', space=vmem, size = 0x12000, scoped, tag = 'internal scratch']
  %s0 = inlined_call_operand.hbm [shape: f32[8,16,16], index: 0, kind: input, shape index: {}]
  %s1 = inlined_call_operand.hbm [shape: f32[8,16,16], index: 1, kind: output, shape index: {0}]
  %s2 = inlined_call_operand.hbm [shape: f32[8,8,8], index: 2, kind: output, shape index: {1}]
  %s3 = inlined_call_operand.vmem [shape: f32[8,4,4], index: 3, kind: output, shape index: {2}]
  %s4 = inlined_call_operand.vmem [shape: f32[8,2,2], index: 4, kind: output, shape index: {3}]
  %5 = xla_tuple %s1, %s2, %s3, %s4
  %s6 = sld [smem:[#allocation0]]
  $region65: #{tpu_custom_call.1} parent=0
    _
  %s8 = ssub.s32 1, %s6
  %s9 = scalar_select 0, %s8, %s6
  $region1: #{tpu_custom_call.1} parent=0
    #allocation2 [shape = 'u8[16384]{0}', space=vmem, size = 0x4000, scoped, tag = 'input window, operand 0']
    #allocation3 [shape = 's32[2]{0}', space=sflag, size = 0x8, scoped, tag = 'scoped memory for tpu_custom_call.1']
    #allocation4 [shape = 's32[2]{0}', space=sflag, size = 0x8, scoped, tag = 'scoped memory for tpu_custom_call.1']
    #allocation5 [shape = 'u8[16384]{0}', space=vmem, size = 0x4000, scoped, tag = 'output window, operand 0']
    #allocation6 [shape = 'u8[8192]{0}', space=vmem, size = 0x2000, scoped, tag = 'output window, operand 1']
    #allocation7 [shape = 's32[2]{0}', space=sflag, size = 0x8, scoped, tag = 'scoped memory for tpu_custom_call.1']
    %10 = vsyncpa [#allocation3], 0
    %s11 = scalar_lea.sflag [#allocation3], 1
    %12 = vsyncpa %s11, 0
    %13 = vsyncpa [#allocation4], 0
    %s14 = scalar_lea.sflag [#allocation4], 1
    %15 = vsyncpa %s14, 0
    %16 = vsyncpa [#allocation7], 0
    %s17 = scalar_lea.sflag [#allocation7], 1
    %18 = vsyncpa %s17, 0
    loop: start=0, step=1, limit=10
    $region2: #{tpu_custom_call.1} parent=1 // loop_pre_header
      _
    $region3: #{tpu_custom_call.1} parent=1 // loop_header
      %s20 = sphi 0, %s24
      %p21 = scmp.ge.s32.totalorder %s20, 10
      %s30 = sphi 0, %s32
      %s33 = sphi 0, %s30
      %s34 = sphi 0, %s33
      %s50 = sphi 0, %s34
      %s56 = sphi 0, %s58
      %s59 = sphi 0, %s56
      %s60 = sphi 0, %s59
      %s76 = sphi 0, %s60
      %s82 = sphi 0, %s84
      %s85 = sphi 0, %s82
      %s86 = sphi 0, %s85
      %s102 = sphi 0, %s86
      %s108 = sphi 0, %s110
      %s111 = sphi 0, %s108
      %s112 = sphi 0, %s111
      %s128 = sphi 0, %s112
      %s134 = sphi 0, %s136
      %s137 = sphi 0, %s134
      %s138 = sphi 0, %s137
      %s154 = sphi 0, %s138
    $region4: #{tpu_custom_call.1} parent=1 // loop_header_branch
      %23 = sbr.rel (%p21) target = $region8
    $region5: #{tpu_custom_call.1} parent=1 // loop_body
      %s25 = ssub.s32 %s20, 1
      %s26 = ssub.s32 %s20, 2
      %s27 = sadd.s32 %s20, 1
      %s28 = ssub.s32 %s20, %s27
      %p29 = scmp.eq.s32.totalorder %s28, 0
      %s31 = sadd.s32 %s30, 1
      %s32 = scalar_select %p29, %s30, %s31
      %p35 = pneg %p29
      %p36 = scmp.eq.s32.totalorder %s20, 7
      %p37 = por %p35, %p36
      %p38 = scmp.ne.s32.totalorder %s30, %s33
      %p39 = scmp.eq.s32.totalorder %s20, 0
      %p40 = por %p38, %p39
      %p41 = scmp.ne.s32.totalorder %s30, %s33
      %p42 = scmp.eq.s32.totalorder %s25, 7
      %p43 = por %p41, %p42
      %p44 = scmp.ne.s32.totalorder %s33, %s34
      %p45 = scmp.eq.s32.totalorder %s25, 0
      %p46 = por %p44, %p45
      %p47 = scmp.ne.s32.totalorder %s33, %s34
      %p48 = scmp.eq.s32.totalorder %s26, 7
      %p49 = por %p47, %p48
      %p51 = scmp.ne.s32.totalorder %s34, %s50
      %p52 = scmp.eq.s32.totalorder %s26, 0
      %p53 = por %p51, %p52
      %s54 = ssub.s32 %s20, %s27
      %p55 = scmp.eq.s32.totalorder %s54, 0
      %s57 = sadd.s32 %s56, 1
      %s58 = scalar_select %p55, %s56, %s57
      %p61 = pneg %p55
      %p62 = scmp.eq.s32.totalorder %s20, 7
      %p63 = por %p61, %p62
      %p64 = scmp.ne.s32.totalorder %s56, %s59
      %p65 = scmp.eq.s32.totalorder %s20, 0
      %p66 = por %p64, %p65
      %p67 = scmp.ne.s32.totalorder %s56, %s59
      %p68 = scmp.eq.s32.totalorder %s25, 7
      %p69 = por %p67, %p68
      %p70 = scmp.ne.s32.totalorder %s59, %s60
      %p71 = scmp.eq.s32.totalorder %s25, 0
      %p72 = por %p70, %p71
      %p73 = scmp.ne.s32.totalorder %s59, %s60
      %p74 = scmp.eq.s32.totalorder %s26, 7
      %p75 = por %p73, %p74
      %p77 = scmp.ne.s32.totalorder %s60, %s76
      %p78 = scmp.eq.s32.totalorder %s26, 0
      %p79 = por %p77, %p78
      %s80 = ssub.s32 %s20, %s27
      %p81 = scmp.eq.s32.totalorder %s80, 0
      %s83 = sadd.s32 %s82, 1
      %s84 = scalar_select %p81, %s82, %s83
      %p87 = pneg %p81
      %p88 = scmp.eq.s32.totalorder %s20, 7
      %p89 = por %p87, %p88
      %p90 = scmp.ne.s32.totalorder %s82, %s85
      %p91 = scmp.eq.s32.totalorder %s20, 0
      %p92 = por %p90, %p91
      %p93 = scmp.ne.s32.totalorder %s82, %s85
      %p94 = scmp.eq.s32.totalorder %s25, 7
      %p95 = por %p93, %p94
      %p96 = scmp.ne.s32.totalorder %s85, %s86
      %p97 = scmp.eq.s32.totalorder %s25, 0
      %p98 = por %p96, %p97
      %p99 = scmp.ne.s32.totalorder %s85, %s86
      %p100 = scmp.eq.s32.totalorder %s26, 7
      %p101 = por %p99, %p100
      %p103 = scmp.ne.s32.totalorder %s86, %s102
      %p104 = scmp.eq.s32.totalorder %s26, 0
      %p105 = por %p103, %p104
      %s106 = ssub.s32 %s20, %s27
      %p107 = scmp.eq.s32.totalorder %s106, 0
      %s109 = sadd.s32 %s108, 1
      %s110 = scalar_select %p107, %s108, %s109
      %p113 = pneg %p107
      %p114 = scmp.eq.s32.totalorder %s20, 7
      %p115 = por %p113, %p114
      %p116 = scmp.ne.s32.totalorder %s108, %s111
      %p117 = scmp.eq.s32.totalorder %s20, 0
      %p118 = por %p116, %p117
      %p119 = scmp.ne.s32.totalorder %s108, %s111
      %p120 = scmp.eq.s32.totalorder %s25, 7
      %p121 = por %p119, %p120
      %p122 = scmp.ne.s32.totalorder %s111, %s112
      %p123 = scmp.eq.s32.totalorder %s25, 0
      %p124 = por %p122, %p123
      %p125 = scmp.ne.s32.totalorder %s111, %s112
      %p126 = scmp.eq.s32.totalorder %s26, 7
      %p127 = por %p125, %p126
      %p129 = scmp.ne.s32.totalorder %s112, %s128
      %p130 = scmp.eq.s32.totalorder %s26, 0
      %p131 = por %p129, %p130
      %s132 = ssub.s32 %s20, %s27
      %p133 = scmp.eq.s32.totalorder %s132, 0
      %s135 = sadd.s32 %s134, 1
      %s136 = scalar_select %p133, %s134, %s135
      %p139 = pneg %p133
      %p140 = scmp.eq.s32.totalorder %s20, 7
      %p141 = por %p139, %p140
      %p142 = scmp.ne.s32.totalorder %s134, %s137
      %p143 = scmp.eq.s32.totalorder %s20, 0
      %p144 = por %p142, %p143
      %p145 = scmp.ne.s32.totalorder %s134, %s137
      %p146 = scmp.eq.s32.totalorder %s25, 7
      %p147 = por %p145, %p146
      %p148 = scmp.ne.s32.totalorder %s137, %s138
      %p149 = scmp.eq.s32.totalorder %s25, 0
      %p150 = por %p148, %p149
      %p151 = scmp.ne.s32.totalorder %s137, %s138
      %p152 = scmp.eq.s32.totalorder %s26, 7
      %p153 = por %p151, %p152
      %p155 = scmp.ne.s32.totalorder %s138, %s154
      %p156 = scmp.eq.s32.totalorder %s26, 0
      %p157 = por %p155, %p156
      %p158 = scmp.le.s32.totalorder 1, %s20
      %p159 = scmp.lt.s32.totalorder %s20, 9
      %p160 = pnand %p158, %p159
      %p161 = pneg %p160
      // Predicated region
      $region9: #{tpu_custom_call.1} parent=5 // pred_check
        _
      $region10: #{tpu_custom_call.1} parent=5 // pred_check_branch
        %163 = sbr.rel (%p160) target = $region12
      $region11: #{tpu_custom_call.1} parent=5 // pred_region
        %s164 = ssub.s32 %s20, 1
      $region12: #{tpu_custom_call.1} parent=5 // pred_fallthru
        _
      %p165 = scmp.lt.s32.totalorder %s20, 8
      // Predicated region
      $region13: #{tpu_custom_call.1} parent=5 // pred_check
        %p166 = pneg %p165
      $region14: #{tpu_custom_call.1} parent=5 // pred_check_branch
        %168 = sbr.rel (%p166) target = $region16
      $region15: #{tpu_custom_call.1} parent=5 // pred_region
        // Predicated region
        $region17: #{tpu_custom_call.1} parent=15 // pred_check
          %p169 = pneg %p40
        $region18: #{tpu_custom_call.1} parent=15 // pred_check_branch
          %171 = sbr.rel (%p169) target = $region20
        $region19: #{tpu_custom_call.1} parent=15 // pred_region
          %s172 = sand.u32 %s30, 1
          %s173 = scalar_lea.sflag [#allocation3], %s172
          %s174 = sand.u32 %s30, 1
          %s175 = smul.addr %s174, 16
          %s176 = scalar_lea.vmem [#allocation2], %s175
          %s178 = ssub.s32 256, 256
          %179 = vsyncadd %s173, %s178
          %s180 = smul.addr %s20, 2
          %s181 = smul.addr %s180, 128
          %s182 = scalar_lea.hbm %s0, %s181
          %s183 = sshll.u32 %s176, 4
          %s184 = int_to_ptr.vmem [resolvable:$true] %s183
          %189 = dma.hbm_to_vmem [thread:$0]  %s182, 256, %s184, %s173, 128, 128, 8
        $region20: #{tpu_custom_call.1} parent=15 // pred_fallthru
          _
      $region16: #{tpu_custom_call.1} parent=5 // pred_fallthru
        _
      %p190 = scmp.le.s32.totalorder 1, %s20
      %p191 = scmp.lt.s32.totalorder %s20, 9
      %p192 = pnand %p190, %p191
      %p193 = pneg %p192
      // Predicated region
      $region21: #{tpu_custom_call.1} parent=5 // pred_check
        _
      $region22: #{tpu_custom_call.1} parent=5 // pred_check_branch
        %195 = sbr.rel (%p192) target = $region24
      $region23: #{tpu_custom_call.1} parent=5 // pred_region
        %s196 = ssub.s32 %s20, 1
        %s197 = sand.u32 %s33, 1
        %s198 = scalar_lea.sflag [#allocation3], %s197
        %s199 = sand.u32 %s33, 1
        %s200 = smul.addr %s199, 16
        %s201 = scalar_lea.vmem [#allocation2], %s200
        // Predicated region
        $region25: #{tpu_custom_call.1} parent=23 // pred_check
          %p202 = pneg %p46
        $region26: #{tpu_custom_call.1} parent=23 // pred_check_branch
          %204 = sbr.rel (%p202) target = $region28
        $region27: #{tpu_custom_call.1} parent=23 // pred_region
          %205 = dma.done %s198, 256
        $region28: #{tpu_custom_call.1} parent=23 // pred_fallthru
          _
        %s206 = sand.u32 %s33, 1
        %s207 = scalar_lea.sflag [#allocation3], %s206
        %s208 = sand.u32 %s33, 1
        %s209 = smul.addr %s208, 16
        %s210 = scalar_lea.vmem [#allocation2], %s209
        %p211 = pneg %p46
        %p212 = pneg %p43
        %p213 = pneg %p72
        %p214 = pneg %p69
        %s215 = sand.u32 %s59, 1
        %s216 = scalar_lea.sflag [#allocation4], %s215
        %s217 = sand.u32 %s59, 1
        %s218 = smul.addr %s217, 16
        %s219 = scalar_lea.vmem [#allocation5], %s218
        %p220 = pneg %p98
        %p221 = pneg %p95
        %s222 = sand.u32 %s85, 1
        %s223 = scalar_lea.sflag [#allocation7], %s222
        %s224 = sand.u32 %s85, 1
        %s225 = smul.addr %s224, 8
        %s226 = scalar_lea.vmem [#allocation6], %s225
        %p227 = pneg %p124
        %p228 = pneg %p121
        %p229 = scmp.lt.s32.totalorder %s25, 7
        %s230 = scalar_select %p229, %s25, 7
        %s231 = smul.addr %s230, 4
        %s232 = scalar_lea.vmem %s3, %s231
        %p233 = pneg %p150
        %p234 = pneg %p147
        %p235 = scmp.lt.s32.totalorder %s25, 7
        %s236 = scalar_select %p235, %s25, 7
        %s237 = smul.addr %s236, 2
        %s238 = scalar_lea.vmem %s4, %s237
        %p239 = scmp.lt.s32.totalorder %s25, 7
        %s240 = scalar_select %p239, %s25, 7
        %s241 = smul.addr %s240, 4
        %s242 = scalar_lea.vmem %s3, %s241
        %p243 = scmp.lt.s32.totalorder %s25, 7
        %s244 = scalar_select %p243, %s25, 7
        %s245 = smul.addr %s244, 2
        %s246 = scalar_lea.vmem %s4, %s245
        %v247 = vld [vmem:[%s201] sm:$0xff]
        %v248 = vld [vmem:[%s201 + $0x8] sm:$0xff]
        %v249 = vlaneseq
        %v250 = vshrl.u32 %v249, 7
        %v251 = vadd.s32 %v250, 8
        %v252 = vlaneseq
        %v253 = vand.u32 %v252, 127
        %vm254 = vcmp.eq.s32.totalorder %v250, 0
        %vm255 = vcmp.eq.s32.totalorder %v251, 0
        %v256 = vrot.slane %v247, 7
        %v257 = vrot.slane %v248, 7
        %vm258 = vcmp.lt.s32.totalorder %v250, 1
        %v259 = vsel %vm258, %v256, %v257
        %v260 = vsel %vm258, %v257, %v256
        %v261 = vsel %vm254, 0.0, %v260
        %v262 = vsel %vm255, 0.0, %v259
        %vm263 = vcmp.eq.s32.totalorder %v250, 15
        %vm264 = vcmp.eq.s32.totalorder %v251, 15
        %v265 = vrot.slane %v247, 1
        %v266 = vrot.slane %v248, 1
        %vm267 = vcmp.lt.s32.totalorder %v250, 7
        %v268 = vsel %vm267, %v265, %v266
        %v269 = vsel %vm267, %v266, %v265
        %v270 = vsel %vm263, 0.0, %v268
        %v271 = vsel %vm264, 0.0, %v269
        %v272 = vadd.f32 %v247, %v261
        %v273 = vadd.f32 %v248, %v262
        %v274 = vadd.f32 %v272, %v270
        %v275 = vadd.f32 %v273, %v271
        %vm276 = vcmp.eq.s32.totalorder %v253, 0
        %vm277 = vcmask 1047680
        %278 = vrot.lane.b32.xlu0 %v274, 16
        %v279 = vpop.permute.xlu0 %278
        %v280 = vsel %vm277, %v279, %v274
        %281 = vrot.lane.b32.xlu0 %v275, 16
        %v282 = vpop.permute.xlu0 %281
        %v283 = vsel %vm277, %v282, %v275
        %284 = vrot.lane.b32.xlu0 %v280, 16
        %v285 = vpop.permute.xlu0 %284
        %286 = vrot.lane.b32.xlu0 %v283, 16
        %v287 = vpop.permute.xlu0 %286
        %v288 = vsel %vm277, %v285, %v274
        %v289 = vsel %vm277, %v287, %v275
        %292 = vrot.lane.b32.xlu0 %v288, 113
        %v293 = vpop.permute.xlu0 %292
        %294 = vrot.lane.b32.xlu0 %v289, 113
        %v295 = vpop.permute.xlu0 %294
        %v298 = vsel %vm276, 0.0, %v293
        %v299 = vsel %vm276, 0.0, %v295
        %vm300 = vcmp.eq.s32.totalorder %v253, 15
        %301 = vrot.lane.b32.xlu0 %v288, 127
        %v302 = vpop.permute.xlu0 %301
        %303 = vrot.lane.b32.xlu0 %v289, 127
        %v304 = vpop.permute.xlu0 %303
        %v307 = vsel %vm300, 0.0, %v302
        %v308 = vsel %vm300, 0.0, %v304
        %v309 = vadd.f32 %v274, %v298
        %v310 = vadd.f32 %v275, %v299
        %v311 = vadd.f32 %v309, %v307
        %v312 = vadd.f32 %v310, %v308
        %v313 = vmul.f32 %v311, 0.11111111
        %v314 = vmul.f32 %v312, 0.11111111
        %vm315 = vcmask 130048
        %316 = vst.msk [vmem:[%s219] sm:$0xff] %vm315, %v313
        %317 = vst.msk [vmem:[%s219 + $0x8] sm:$0xff] %vm315, %v314
        %v318 = vld [vmem:[%s219] sm:$0xff]
        %v319 = vld [vmem:[%s219 + $0x8] sm:$0xff]
        %v320 = vmul.u32 %v250, 2
        %v321 = vsub.s32 %v253, %v320
        %v322 = vadd.s32 %v321, 1
        %vm323 = vcmp.eq.s32.totalorder %v322, 0
        %vm324 = vcmp.eq.s32.totalorder %v322, 3
        %vm325 = vmor %vm323, %vm324
        %v326 = vsel %vm325, 1.0, 0.0
        %vm327 = vcmp.eq.s32.totalorder %v322, 1
        %vm328 = vcmp.eq.s32.totalorder %v322, 2
        %vm329 = vmor %vm327, %vm328
        %v330 = vsel %vm329, 2.0, 0.0
        %v331 = vadd.f32 %v326, %v330
        %v332 = vmul.f32 %v331, 0.16666667
        %v333 = vmul.u32 %v253, 2
        %v334 = vsub.s32 %v250, %v333
        %v335 = vsub.s32 %v251, %v333
        %v336 = vadd.s32 %v334, 1
        %v337 = vadd.s32 %v335, 1
        %vm338 = vcmp.eq.s32.totalorder %v336, 0
        %vm339 = vcmp.eq.s32.totalorder %v337, 0
        %vm340 = vcmp.eq.s32.totalorder %v336, 3
        %vm341 = vcmp.eq.s32.totalorder %v337, 3
        %vm342 = vmor %vm338, %vm340
        %vm343 = vmor %vm339, %vm341
        %v344 = vsel %vm342, 1.0, 0.0
        %v345 = vsel %vm343, 1.0, 0.0
        %vm346 = vcmp.eq.s32.totalorder %v336, 1
        %vm347 = vcmp.eq.s32.totalorder %v337, 1
        %vm348 = vcmp.eq.s32.totalorder %v336, 2
        %vm349 = vcmp.eq.s32.totalorder %v337, 2
        %vm350 = vmor %vm346, %vm348
        %vm351 = vmor %vm347, %vm349
        %v352 = vsel %vm350, 2.0, 0.0
        %v353 = vsel %vm351, 2.0, 0.0
        %v354 = vadd.f32 %v344, %v352
        %v355 = vadd.f32 %v345, %v353
        %v356 = vmul.f32 %v354, 0.16666667
        %v357 = vmul.f32 %v355, 0.16666667
        %v359 = vsel %vm315, %v332, 0
        %361 = vmatprep.subr.mxu0 0.0
        %362 = vmatpush1.msra.mxu0 %v318
        %363 = vmatprep.subr.mxu0 0.0
        %364 = vmatpush1.msra.mxu0 %v319
        %365 = vmatprep.subr.mxu0 0.0
        %366 = vmatpush1.msra.mxu0 0.0
        %367 = vmatprep.subr.mxu0 0.0
        %368 = vmatpush1.msra.mxu0 0.0
        %369 = vmatprep.subr.mxu0 0.0
        %370 = vmatpush1.msra.mxu0 0.0
        %371 = vmatprep.subr.mxu0 0.0
        %372 = vmatpush1.msra.mxu0 0.0
        %373 = vmatprep.subr.mxu0 0.0
        %374 = vmatpush1.msra.mxu0 0.0
        %375 = vmatprep.subr.mxu0 0.0
        %376 = vmatpush1.msra.mxu0 0.0
        %377 = vmatprep.subr.mxu0 0.0
        %378 = vmatpush1.msra.mxu0 0.0
        %379 = vmatprep.subr.mxu0 0.0
        %380 = vmatpush1.msra.mxu0 0.0
        %381 = vmatprep.subr.mxu0 0.0
        %382 = vmatpush1.msra.mxu0 0.0
        %383 = vmatprep.subr.mxu0 0.0
        %384 = vmatpush1.msra.mxu0 0.0
        %385 = vmatprep.subr.mxu0 0.0
        %386 = vmatpush1.msra.mxu0 0.0
        %387 = vmatprep.subr.mxu0 0.0
        %388 = vmatpush1.msra.mxu0 0.0
        %389 = vmatprep.subr.mxu0 0.0
        %390 = vmatpush1.msra.mxu0 0.0
        %391 = vmatprep.subr.mxu0 0.0
        %392 = vmatpush1.msra.mxu0 0.0
        %393 = vmatprep.subr.mxu0 0.0
        %394 = vmatpush1.msra.mxu0 0.0
        %395 = vmatprep.subr.mxu0 0.0
        %396 = vmatpush1.msra.mxu0 0.0
        %397 = vmatprep.subr.mxu0 0.0
        %398 = vmatpush1.msra.mxu0 0.0
        %399 = vmatprep.subr.mxu0 0.0
        %400 = vmatpush1.msra.mxu0 0.0
        %401 = vmatprep.subr.mxu0 0.0
        %402 = vmatpush1.msra.mxu0 0.0
        %403 = vmatprep.subr.mxu0 0.0
        %404 = vmatpush1.msra.mxu0 0.0
        %405 = vmatprep.subr.mxu0 0.0
        %406 = vmatpush1.msra.mxu0 0.0
        %407 = vmatprep.subr.mxu0 0.0
        %408 = vmatpush1.msra.mxu0 0.0
        %409 = vmatprep.subr.mxu0 0.0
        %410 = vmatpush1.msra.mxu0 0.0
        %411 = vmatprep.subr.mxu0 0.0
        %412 = vmatpush1.msra.mxu0 0.0
        %413 = vmatprep.subr.mxu0 0.0
        %414 = vmatpush1.msra.mxu0 0.0
        %415 = vmatprep.subr.mxu0 0.0
        %416 = vmatpush1.msra.mxu0 0.0
        %417 = vmatprep.subr.mxu0 0.0
        %418 = vmatpush1.msra.mxu0 0.0
        %419 = vmatprep.subr.mxu0 0.0
        %420 = vmatpush1.msra.mxu0 0.0
        %421 = vmatprep.subr.mxu0 0.0
        %422 = vmatpush1.msra.mxu0 0.0
        %423 = vmatprep.subr.mxu0 0.0
        %424 = vmatpush1.msra.mxu0 0.0
        %425 = vmatprep.mubr.f32.mxu0 0.0
        %426 = vmatmul.mubr.f32.gmra.mrb[0].mxu0 %v359
        %v427 = vpop.f32.mrb[0].mxu0
        %v428 = vadd.f32 0.0, %v427
        %v429 = vpop.f32.mrb[0].mxu0
        %430 = vdwg.mxu0
        %v432 = vsel %vm315, %v428, 0
        %434 = vmatprep.subr.mxu0 0.0
        %435 = vmatpush1.msra.mxu0 %v356
        %436 = vmatprep.subr.mxu0 0.0
        %437 = vmatpush1.msra.mxu0 %v357
        %438 = vmatprep.subr.mxu0 0.0
        %439 = vmatpush1.msra.mxu0 0.0
        %440 = vmatprep.subr.mxu0 0.0
        %441 = vmatpush1.msra.mxu0 0.0
        %442 = vmatprep.subr.mxu0 0.0
        %443 = vmatpush1.msra.mxu0 0.0
        %444 = vmatprep.subr.mxu0 0.0
        %445 = vmatpush1.msra.mxu0 0.0
        %446 = vmatprep.subr.mxu0 0.0
        %447 = vmatpush1.msra.mxu0 0.0
        %448 = vmatprep.subr.mxu0 0.0
        %449 = vmatpush1.msra.mxu0 0.0
        %450 = vmatprep.subr.mxu0 0.0
        %451 = vmatpush1.msra.mxu0 0.0
        %452 = vmatprep.subr.mxu0 0.0
        %453 = vmatpush1.msra.mxu0 0.0
        %454 = vmatprep.subr.mxu0 0.0
        %455 = vmatpush1.msra.mxu0 0.0
        %456 = vmatprep.subr.mxu0 0.0
        %457 = vmatpush1.msra.mxu0 0.0
        %458 = vmatprep.subr.mxu0 0.0
        %459 = vmatpush1.msra.mxu0 0.0
        %460 = vmatprep.subr.mxu0 0.0
        %461 = vmatpush1.msra.mxu0 0.0
        %462 = vmatprep.subr.mxu0 0.0
        %463 = vmatpush1.msra.mxu0 0.0
        %464 = vmatprep.subr.mxu0 0.0
        %465 = vmatpush1.msra.mxu0 0.0
        %466 = vmatprep.subr.mxu0 0.0
        %467 = vmatpush1.msra.mxu0 0.0
        %468 = vmatprep.subr.mxu0 0.0
        %469 = vmatpush1.msra.mxu0 0.0
        %470 = vmatprep.subr.mxu0 0.0
        %471 = vmatpush1.msra.mxu0 0.0
        %472 = vmatprep.subr.mxu0 0.0
        %473 = vmatpush1.msra.mxu0 0.0
        %474 = vmatprep.subr.mxu0 0.0
        %475 = vmatpush1.msra.mxu0 0.0
        %476 = vmatprep.subr.mxu0 0.0
        %477 = vmatpush1.msra.mxu0 0.0
        %478 = vmatprep.subr.mxu0 0.0
        %479 = vmatpush1.msra.mxu0 0.0
        %480 = vmatprep.subr.mxu0 0.0
        %481 = vmatpush1.msra.mxu0 0.0
        %482 = vmatprep.subr.mxu0 0.0
        %483 = vmatpush1.msra.mxu0 0.0
        %484 = vmatprep.subr.mxu0 0.0
        %485 = vmatpush1.msra.mxu0 0.0
        %486 = vmatprep.subr.mxu0 0.0
        %487 = vmatpush1.msra.mxu0 0.0
        %488 = vmatprep.subr.mxu0 0.0
        %489 = vmatpush1.msra.mxu0 0.0
        %490 = vmatprep.subr.mxu0 0.0
        %491 = vmatpush1.msra.mxu0 0.0
        %492 = vmatprep.subr.mxu0 0.0
        %493 = vmatpush1.msra.mxu0 0.0
        %494 = vmatprep.subr.mxu0 0.0
        %495 = vmatpush1.msra.mxu0 0.0
        %496 = vmatprep.subr.mxu0 0.0
        %497 = vmatpush1.msra.mxu0 0.0
        %498 = vmatprep.mubr.f32.mxu0 0.0
        %499 = vmatmul.mubr.f32.gmra.mrb[0].mxu0 %v432
        %v500 = vpop.f32.mrb[0].mxu0
        %v501 = vadd.f32 0.0, %v500
        %v502 = vpop.f32.mrb[0].mxu0
        %503 = vdwg.mxu0
        %v504 = vrot.slane %v501, 7
        %v505 = vsel %vm254, 0.0, %v504
        %vm506 = vcmp.eq.s32.totalorder %v250, 7
        %v507 = vrot.slane %v501, 1
        %v508 = vsel %vm506, 0.0, %v507
        %v509 = vadd.f32 %v501, %v505
        %v510 = vadd.f32 %v509, %v508
        %vm511 = vcmask 1047616
        %512 = vrot.lane.b32.xlu0 %v510, 8
        %v513 = vpop.permute.xlu0 %512
        %v514 = vsel %vm511, %v513, %v510
        %515 = vrot.lane.b32.xlu0 %v514, 8
        %v516 = vpop.permute.xlu0 %515
        %v517 = vsel %vm511, %v516, %v510
        %519 = vrot.lane.b32.xlu0 %v517, 121
        %v520 = vpop.permute.xlu0 %519
        %v522 = vsel %vm276, 0.0, %v520
        %vm523 = vcmp.eq.s32.totalorder %v253, 7
        %524 = vrot.lane.b32.xlu0 %v517, 127
        %v525 = vpop.permute.xlu0 %524
        %v527 = vsel %vm523, 0.0, %v525
        %v528 = vadd.f32 %v510, %v522
        %v529 = vadd.f32 %v528, %v527
        %v530 = vmul.f32 %v529, 0.11111111
        %vm531 = vcmask 64512
        %532 = vst.msk [vmem:[%s226] sm:$0xff] %vm531, %v530
        %v533 = vld [vmem:[%s226] sm:$0xff]
        %v534 = vsel %vm531, %v332, 0
        %536 = vmatprep.subr.mxu0 0.0
        %537 = vmatpush1.msra.mxu0 %v533
        %538 = vmatprep.subr.mxu0 0.0
        %539 = vmatpush1.msra.mxu0 0.0
        %540 = vmatprep.subr.mxu0 0.0
        %541 = vmatpush1.msra.mxu0 0.0
        %542 = vmatprep.subr.mxu0 0.0
        %543 = vmatpush1.msra.mxu0 0.0
        %544 = vmatprep.subr.mxu0 0.0
        %545 = vmatpush1.msra.mxu0 0.0
        %546 = vmatprep.subr.mxu0 0.0
        %547 = vmatpush1.msra.mxu0 0.0
        %548 = vmatprep.subr.mxu0 0.0
        %549 = vmatpush1.msra.mxu0 0.0
        %550 = vmatprep.subr.mxu0 0.0
        %551 = vmatpush1.msra.mxu0 0.0
        %552 = vmatprep.subr.mxu0 0.0
        %553 = vmatpush1.msra.mxu0 0.0
        %554 = vmatprep.subr.mxu0 0.0
        %555 = vmatpush1.msra.mxu0 0.0
        %556 = vmatprep.subr.mxu0 0.0
        %557 = vmatpush1.msra.mxu0 0.0
        %558 = vmatprep.subr.mxu0 0.0
        %559 = vmatpush1.msra.mxu0 0.0
        %560 = vmatprep.subr.mxu0 0.0
        %561 = vmatpush1.msra.mxu0 0.0
        %562 = vmatprep.subr.mxu0 0.0
        %563 = vmatpush1.msra.mxu0 0.0
        %564 = vmatprep.subr.mxu0 0.0
        %565 = vmatpush1.msra.mxu0 0.0
        %566 = vmatprep.subr.mxu0 0.0
        %567 = vmatpush1.msra.mxu0 0.0
        %568 = vmatprep.subr.mxu0 0.0
        %569 = vmatpush1.msra.mxu0 0.0
        %570 = vmatprep.subr.mxu0 0.0
        %571 = vmatpush1.msra.mxu0 0.0
        %572 = vmatprep.subr.mxu0 0.0
        %573 = vmatpush1.msra.mxu0 0.0
        %574 = vmatprep.subr.mxu0 0.0
        %575 = vmatpush1.msra.mxu0 0.0
        %576 = vmatprep.subr.mxu0 0.0
        %577 = vmatpush1.msra.mxu0 0.0
        %578 = vmatprep.subr.mxu0 0.0
        %579 = vmatpush1.msra.mxu0 0.0
        %580 = vmatprep.subr.mxu0 0.0
        %581 = vmatpush1.msra.mxu0 0.0
        %582 = vmatprep.subr.mxu0 0.0
        %583 = vmatpush1.msra.mxu0 0.0
        %584 = vmatprep.subr.mxu0 0.0
        %585 = vmatpush1.msra.mxu0 0.0
        %586 = vmatprep.subr.mxu0 0.0
        %587 = vmatpush1.msra.mxu0 0.0
        %588 = vmatprep.subr.mxu0 0.0
        %589 = vmatpush1.msra.mxu0 0.0
        %590 = vmatprep.subr.mxu0 0.0
        %591 = vmatpush1.msra.mxu0 0.0
        %592 = vmatprep.subr.mxu0 0.0
        %593 = vmatpush1.msra.mxu0 0.0
        %594 = vmatprep.subr.mxu0 0.0
        %595 = vmatpush1.msra.mxu0 0.0
        %596 = vmatprep.subr.mxu0 0.0
        %597 = vmatpush1.msra.mxu0 0.0
        %598 = vmatprep.subr.mxu0 0.0
        %599 = vmatpush1.msra.mxu0 0.0
        %600 = vmatprep.mubr.f32.mxu0 0.0
        %601 = vmatmul.mubr.f32.gmra.mrb[0].mxu0 %v534
        %v602 = vpop.f32.mrb[0].mxu0
        %v603 = vadd.f32 0.0, %v602
        %v604 = vpop.f32.mrb[0].mxu0
        %605 = vdwg.mxu0
        %v607 = vsel %vm531, %v603, 0
        %609 = vmatprep.subr.mxu0 0.0
        %610 = vmatpush1.msra.mxu0 %v356
        %611 = vmatprep.subr.mxu0 0.0
        %612 = vmatpush1.msra.mxu0 0.0
        %613 = vmatprep.subr.mxu0 0.0
        %614 = vmatpush1.msra.mxu0 0.0
        %615 = vmatprep.subr.mxu0 0.0
        %616 = vmatpush1.msra.mxu0 0.0
        %617 = vmatprep.subr.mxu0 0.0
        %618 = vmatpush1.msra.mxu0 0.0
        %619 = vmatprep.subr.mxu0 0.0
        %620 = vmatpush1.msra.mxu0 0.0
        %621 = vmatprep.subr.mxu0 0.0
        %622 = vmatpush1.msra.mxu0 0.0
        %623 = vmatprep.subr.mxu0 0.0
        %624 = vmatpush1.msra.mxu0 0.0
        %625 = vmatprep.subr.mxu0 0.0
        %626 = vmatpush1.msra.mxu0 0.0
        %627 = vmatprep.subr.mxu0 0.0
        %628 = vmatpush1.msra.mxu0 0.0
        %629 = vmatprep.subr.mxu0 0.0
        %630 = vmatpush1.msra.mxu0 0.0
        %631 = vmatprep.subr.mxu0 0.0
        %632 = vmatpush1.msra.mxu0 0.0
        %633 = vmatprep.subr.mxu0 0.0
        %634 = vmatpush1.msra.mxu0 0.0
        %635 = vmatprep.subr.mxu0 0.0
        %636 = vmatpush1.msra.mxu0 0.0
        %637 = vmatprep.subr.mxu0 0.0
        %638 = vmatpush1.msra.mxu0 0.0
        %639 = vmatprep.subr.mxu0 0.0
        %640 = vmatpush1.msra.mxu0 0.0
        %641 = vmatprep.subr.mxu0 0.0
        %642 = vmatpush1.msra.mxu0 0.0
        %643 = vmatprep.subr.mxu0 0.0
        %644 = vmatpush1.msra.mxu0 0.0
        %645 = vmatprep.subr.mxu0 0.0
        %646 = vmatpush1.msra.mxu0 0.0
        %647 = vmatprep.subr.mxu0 0.0
        %648 = vmatpush1.msra.mxu0 0.0
        %649 = vmatprep.subr.mxu0 0.0
        %650 = vmatpush1.msra.mxu0 0.0
        %651 = vmatprep.subr.mxu0 0.0
        %652 = vmatpush1.msra.mxu0 0.0
        %653 = vmatprep.subr.mxu0 0.0
        %654 = vmatpush1.msra.mxu0 0.0
        %655 = vmatprep.subr.mxu0 0.0
        %656 = vmatpush1.msra.mxu0 0.0
        %657 = vmatprep.subr.mxu0 0.0
        %658 = vmatpush1.msra.mxu0 0.0
        %659 = vmatprep.subr.mxu0 0.0
        %660 = vmatpush1.msra.mxu0 0.0
        %661 = vmatprep.subr.mxu0 0.0
        %662 = vmatpush1.msra.mxu0 0.0
        %663 = vmatprep.subr.mxu0 0.0
        %664 = vmatpush1.msra.mxu0 0.0
        %665 = vmatprep.subr.mxu0 0.0
        %666 = vmatpush1.msra.mxu0 0.0
        %667 = vmatprep.subr.mxu0 0.0
        %668 = vmatpush1.msra.mxu0 0.0
        %669 = vmatprep.subr.mxu0 0.0
        %670 = vmatpush1.msra.mxu0 0.0
        %671 = vmatprep.subr.mxu0 0.0
        %672 = vmatpush1.msra.mxu0 0.0
        %673 = vmatprep.mubr.f32.mxu0 0.0
        %674 = vmatmul.mubr.f32.gmra.mrb[0].mxu0 %v607
        %v675 = vpop.f32.mrb[0].mxu0
        %v676 = vadd.f32 0.0, %v675
        %v677 = vpop.f32.mrb[0].mxu0
        %678 = vdwg.mxu0
        %vm679 = vcmask 1047556
        %v680 = vrot.slane %v676, 4
        %v681 = vsel %vm679, %v680, %v676
        %v682 = vrot.slane %v681, 4
        %v683 = vsel %vm679, %v682, %v676
        %v685 = vrot.slane %v683, 3
        %v687 = vsel %vm254, 0.0, %v685
        %vm688 = vcmp.eq.s32.totalorder %v250, 3
        %v689 = vrot.slane %v683, 1
        %v691 = vsel %vm688, 0.0, %v689
        %v692 = vadd.f32 %v676, %v687
        %v693 = vadd.f32 %v692, %v691
        %vm694 = vcmask 1047584
        %695 = vrot.lane.b32.xlu0 %v693, 4
        %v696 = vpop.permute.xlu0 %695
        %v697 = vsel %vm694, %v696, %v693
        %698 = vrot.lane.b32.xlu0 %v697, 4
        %v699 = vpop.permute.xlu0 %698
        %v700 = vsel %vm694, %v699, %v693
        %702 = vrot.lane.b32.xlu0 %v700, 125
        %v703 = vpop.permute.xlu0 %702
        %v705 = vsel %vm276, 0.0, %v703
        %vm706 = vcmp.eq.s32.totalorder %v253, 3
        %707 = vrot.lane.b32.xlu0 %v700, 127
        %v708 = vpop.permute.xlu0 %707
        %v710 = vsel %vm706, 0.0, %v708
        %v711 = vadd.f32 %v693, %v705
        %v712 = vadd.f32 %v711, %v710
        %v713 = vmul.f32 %v712, 0.11111111
        %vm714 = vcmask 27648
        %715 = vst.msk [vmem:[%s242] sm:$0xf] %vm714, %v713
        %v716 = vld [vmem:[%s242] sm:$0xf]
        %v717 = vrot.slane %v716, 4
        %v718 = vsel %vm679, %v717, %v716
        %v719 = vrot.slane %v718, 4
        %v720 = vsel %vm679, %v719, %v716
        %v722 = vrot.slane %v720, 3
        %v724 = vsel %vm254, 0.0, %v722
        %v725 = vrot.slane %v720, 1
        %v727 = vsel %vm688, 0.0, %v725
        %v728 = vadd.f32 %v716, %v724
        %v729 = vadd.f32 %v728, %v727
        %730 = vrot.lane.b32.xlu0 %v729, 4
        %v731 = vpop.permute.xlu0 %730
        %v732 = vsel %vm694, %v731, %v729
        %733 = vrot.lane.b32.xlu0 %v732, 4
        %v734 = vpop.permute.xlu0 %733
        %v735 = vsel %vm694, %v734, %v729
        %737 = vrot.lane.b32.xlu0 %v735, 125
        %v738 = vpop.permute.xlu0 %737
        %v740 = vsel %vm276, 0.0, %v738
        %741 = vrot.lane.b32.xlu0 %v735, 127
        %v742 = vpop.permute.xlu0 %741
        %v744 = vsel %vm706, 0.0, %v742
        %v745 = vadd.f32 %v729, %v740
        %v746 = vadd.f32 %v745, %v744
        %v747 = vmul.f32 %v746, 0.11111111
        %vm748 = vcmask 31744
        %v749 = vsel %vm748, %v332, 0
        %vm751 = vcmask 1043456
        %v753 = vsel %vm751, %v747, 0
        %755 = vmatprep.subr.mxu0 0.0
        %756 = vmatpush1.msra.mxu0 %v753
        %757 = vmatprep.subr.mxu0 0.0
        %758 = vmatpush1.msra.mxu0 0.0
        %759 = vmatprep.subr.mxu0 0.0
        %760 = vmatpush1.msra.mxu0 0.0
        %761 = vmatprep.subr.mxu0 0.0
        %762 = vmatpush1.msra.mxu0 0.0
        %763 = vmatprep.subr.mxu0 0.0
        %764 = vmatpush1.msra.mxu0 0.0
        %765 = vmatprep.subr.mxu0 0.0
        %766 = vmatpush1.msra.mxu0 0.0
        %767 = vmatprep.subr.mxu0 0.0
        %768 = vmatpush1.msra.mxu0 0.0
        %769 = vmatprep.subr.mxu0 0.0
        %770 = vmatpush1.msra.mxu0 0.0
        %771 = vmatprep.subr.mxu0 0.0
        %772 = vmatpush1.msra.mxu0 0.0
        %773 = vmatprep.subr.mxu0 0.0
        %774 = vmatpush1.msra.mxu0 0.0
        %775 = vmatprep.subr.mxu0 0.0
        %776 = vmatpush1.msra.mxu0 0.0
        %777 = vmatprep.subr.mxu0 0.0
        %778 = vmatpush1.msra.mxu0 0.0
        %779 = vmatprep.subr.mxu0 0.0
        %780 = vmatpush1.msra.mxu0 0.0
        %781 = vmatprep.subr.mxu0 0.0
        %782 = vmatpush1.msra.mxu0 0.0
        %783 = vmatprep.subr.mxu0 0.0
        %784 = vmatpush1.msra.mxu0 0.0
        %785 = vmatprep.subr.mxu0 0.0
        %786 = vmatpush1.msra.mxu0 0.0
        %787 = vmatprep.subr.mxu0 0.0
        %788 = vmatpush1.msra.mxu0 0.0
        %789 = vmatprep.subr.mxu0 0.0
        %790 = vmatpush1.msra.mxu0 0.0
        %791 = vmatprep.subr.mxu0 0.0
        %792 = vmatpush1.msra.mxu0 0.0
        %793 = vmatprep.subr.mxu0 0.0
        %794 = vmatpush1.msra.mxu0 0.0
        %795 = vmatprep.subr.mxu0 0.0
        %796 = vmatpush1.msra.mxu0 0.0
        %797 = vmatprep.subr.mxu0 0.0
        %798 = vmatpush1.msra.mxu0 0.0
        %799 = vmatprep.subr.mxu0 0.0
        %800 = vmatpush1.msra.mxu0 0.0
        %801 = vmatprep.subr.mxu0 0.0
        %802 = vmatpush1.msra.mxu0 0.0
        %803 = vmatprep.subr.mxu0 0.0
        %804 = vmatpush1.msra.mxu0 0.0
        %805 = vmatprep.subr.mxu0 0.0
        %806 = vmatpush1.msra.mxu0 0.0
        %807 = vmatprep.subr.mxu0 0.0
        %808 = vmatpush1.msra.mxu0 0.0
        %809 = vmatprep.subr.mxu0 0.0
        %810 = vmatpush1.msra.mxu0 0.0
        %811 = vmatprep.subr.mxu0 0.0
        %812 = vmatpush1.msra.mxu0 0.0
        %813 = vmatprep.subr.mxu0 0.0
        %814 = vmatpush1.msra.mxu0 0.0
        %815 = vmatprep.subr.mxu0 0.0
        %816 = vmatpush1.msra.mxu0 0.0
        %817 = vmatprep.subr.mxu0 0.0
        %818 = vmatpush1.msra.mxu0 0.0
        %819 = vmatprep.mubr.f32.mxu0 0.0
        %820 = vmatmul.mubr.f32.gmra.mrb[0].mxu0 %v749
        %v821 = vpop.f32.mrb[0].mxu0
        %v822 = vadd.f32 0.0, %v821
        %v823 = vpop.f32.mrb[0].mxu0
        %824 = vdwg.mxu0
        %v826 = vsel %vm748, %v822, 0
        %v829 = vsel %vm751, %v356, 0
        %831 = vmatprep.subr.mxu0 0.0
        %832 = vmatpush1.msra.mxu0 %v829
        %833 = vmatprep.subr.mxu0 0.0
        %834 = vmatpush1.msra.mxu0 0.0
        %835 = vmatprep.subr.mxu0 0.0
        %836 = vmatpush1.msra.mxu0 0.0
        %837 = vmatprep.subr.mxu0 0.0
        %838 = vmatpush1.msra.mxu0 0.0
        %839 = vmatprep.subr.mxu0 0.0
        %840 = vmatpush1.msra.mxu0 0.0
        %841 = vmatprep.subr.mxu0 0.0
        %842 = vmatpush1.msra.mxu0 0.0
        %843 = vmatprep.subr.mxu0 0.0
        %844 = vmatpush1.msra.mxu0 0.0
        %845 = vmatprep.subr.mxu0 0.0
        %846 = vmatpush1.msra.mxu0 0.0
        %847 = vmatprep.subr.mxu0 0.0
        %848 = vmatpush1.msra.mxu0 0.0
        %849 = vmatprep.subr.mxu0 0.0
        %850 = vmatpush1.msra.mxu0 0.0
        %851 = vmatprep.subr.mxu0 0.0
        %852 = vmatpush1.msra.mxu0 0.0
        %853 = vmatprep.subr.mxu0 0.0
        %854 = vmatpush1.msra.mxu0 0.0
        %855 = vmatprep.subr.mxu0 0.0
        %856 = vmatpush1.msra.mxu0 0.0
        %857 = vmatprep.subr.mxu0 0.0
        %858 = vmatpush1.msra.mxu0 0.0
        %859 = vmatprep.subr.mxu0 0.0
        %860 = vmatpush1.msra.mxu0 0.0
        %861 = vmatprep.subr.mxu0 0.0
        %862 = vmatpush1.msra.mxu0 0.0
        %863 = vmatprep.subr.mxu0 0.0
        %864 = vmatpush1.msra.mxu0 0.0
        %865 = vmatprep.subr.mxu0 0.0
        %866 = vmatpush1.msra.mxu0 0.0
        %867 = vmatprep.subr.mxu0 0.0
        %868 = vmatpush1.msra.mxu0 0.0
        %869 = vmatprep.subr.mxu0 0.0
        %870 = vmatpush1.msra.mxu0 0.0
        %871 = vmatprep.subr.mxu0 0.0
        %872 = vmatpush1.msra.mxu0 0.0
        %873 = vmatprep.subr.mxu0 0.0
        %874 = vmatpush1.msra.mxu0 0.0
        %875 = vmatprep.subr.mxu0 0.0
        %876 = vmatpush1.msra.mxu0 0.0
        %877 = vmatprep.subr.mxu0 0.0
        %878 = vmatpush1.msra.mxu0 0.0
        %879 = vmatprep.subr.mxu0 0.0
        %880 = vmatpush1.msra.mxu0 0.0
        %881 = vmatprep.subr.mxu0 0.0
        %882 = vmatpush1.msra.mxu0 0.0
        %883 = vmatprep.subr.mxu0 0.0
        %884 = vmatpush1.msra.mxu0 0.0
        %885 = vmatprep.subr.mxu0 0.0
        %886 = vmatpush1.msra.mxu0 0.0
        %887 = vmatprep.subr.mxu0 0.0
        %888 = vmatpush1.msra.mxu0 0.0
        %889 = vmatprep.subr.mxu0 0.0
        %890 = vmatpush1.msra.mxu0 0.0
        %891 = vmatprep.subr.mxu0 0.0
        %892 = vmatpush1.msra.mxu0 0.0
        %893 = vmatprep.subr.mxu0 0.0
        %894 = vmatpush1.msra.mxu0 0.0
        %895 = vmatprep.mubr.f32.mxu0 0.0
        %896 = vmatmul.mubr.f32.gmra.mrb[0].mxu0 %v826
        %v897 = vpop.f32.mrb[0].mxu0
        %v898 = vadd.f32 0.0, %v897
        %v899 = vpop.f32.mrb[0].mxu0
        %900 = vdwg.mxu0
        %vm901 = vcmask 1047554
        %v902 = vrot.slane %v898, 6
        %v903 = vsel %vm901, %v902, %v898
        %v904 = vrot.slane %v903, 6
        %v905 = vsel %vm901, %v904, %v898
        %v907 = vrot.slane %v905, 1
        %v909 = vsel %vm254, 0.0, %v907
        %vm910 = vcmp.eq.s32.totalorder %v250, 1
        %v911 = vsel %vm910, 0.0, %v907
        %v912 = vadd.f32 %v898, %v909
        %v913 = vadd.f32 %v912, %v911
        %vm914 = vcmask 1047568
        %915 = vrot.lane.b32.xlu0 %v913, 2
        %v916 = vpop.permute.xlu0 %915
        %v917 = vsel %vm914, %v916, %v913
        %918 = vrot.lane.b32.xlu0 %v917, 2
        %v919 = vpop.permute.xlu0 %918
        %v920 = vsel %vm914, %v919, %v913
        %922 = vrot.lane.b32.xlu0 %v920, 127
        %v923 = vpop.permute.xlu0 %922
        %v925 = vsel %vm276, 0.0, %v923
        %vm926 = vcmp.eq.s32.totalorder %v253, 1
        %v927 = vsel %vm926, 0.0, %v923
        %v928 = vadd.f32 %v913, %v925
        %v929 = vadd.f32 %v928, %v927
        %v930 = vmul.f32 %v929, 0.11111111
        %vm931 = vcmask 9216
        %932 = vst.msk [vmem:[%s246] sm:$0x3] %vm931, %v930
        %s933 = sand.u32 %s59, 1
        %s934 = scalar_lea.sflag [#allocation4], %s933
        %s935 = sand.u32 %s59, 1
        %s936 = smul.addr %s935, 16
        %s937 = scalar_lea.vmem [#allocation5], %s936
        %s938 = sand.u32 %s85, 1
        %s939 = scalar_lea.sflag [#allocation7], %s938
        %s940 = sand.u32 %s85, 1
        %s941 = smul.addr %s940, 8
        %s942 = scalar_lea.vmem [#allocation6], %s941
        %p943 = scmp.lt.s32.totalorder %s25, 7
        %s944 = scalar_select %p943, %s25, 7
        %s945 = smul.addr %s944, 4
        %s946 = scalar_lea.vmem %s3, %s945
        %p947 = scmp.lt.s32.totalorder %s25, 7
        %s948 = scalar_select %p947, %s25, 7
        %s949 = smul.addr %s948, 2
        %s950 = scalar_lea.vmem %s4, %s949
        // Predicated region
        $region29: #{tpu_custom_call.1} parent=23 // pred_check
          %p951 = pneg %p69
        $region30: #{tpu_custom_call.1} parent=23 // pred_check_branch
          %953 = sbr.rel (%p951) target = $region32
        $region31: #{tpu_custom_call.1} parent=23 // pred_region
          %s955 = ssub.s32 256, 256
          %956 = vsyncadd %s934, %s955
          %s957 = smul.addr %s25, 2
          %s958 = smul.addr %s957, 128
          %s959 = scalar_lea.hbm %s1, %s958
          %s960 = sshll.u32 %s937, 4
          %s961 = int_to_ptr.vmem [resolvable:$true] %s960
          %966 = dma.vmem_to_hbm [thread:$0]  %s961, 256, %s959, %s934, 128, 128, 8
        $region32: #{tpu_custom_call.1} parent=23 // pred_fallthru
          _
        // Predicated region
        $region33: #{tpu_custom_call.1} parent=23 // pred_check
          %p967 = pneg %p95
        $region34: #{tpu_custom_call.1} parent=23 // pred_check_branch
          %969 = sbr.rel (%p967) target = $region36
        $region35: #{tpu_custom_call.1} parent=23 // pred_region
          %s971 = ssub.s32 128, 128
          %972 = vsyncadd %s939, %s971
          %s973 = smul.addr %s25, 128
          %s974 = scalar_lea.hbm %s2, %s973
          %s976 = sshll.u32 %s942, 4
          %s977 = int_to_ptr.vmem [resolvable:$true] %s976
          %979 = dma.vmem_to_hbm [thread:$0]  %s977, 128, %s974, %s939
        $region36: #{tpu_custom_call.1} parent=23 // pred_fallthru
          _
        // Predicated region
        $region37: #{tpu_custom_call.1} parent=23 // pred_check
          %p980 = pneg %p121
        $region38: #{tpu_custom_call.1} parent=23 // pred_check_branch
          %982 = sbr.rel (%p980) target = $region40
        $region39: #{tpu_custom_call.1} parent=23 // pred_region
          _
        $region40: #{tpu_custom_call.1} parent=23 // pred_fallthru
          _
        // Predicated region
        $region41: #{tpu_custom_call.1} parent=23 // pred_check
          %p983 = pneg %p147
        $region42: #{tpu_custom_call.1} parent=23 // pred_check_branch
          %985 = sbr.rel (%p983) target = $region44
        $region43: #{tpu_custom_call.1} parent=23 // pred_region
          _
        $region44: #{tpu_custom_call.1} parent=23 // pred_fallthru
          _
      $region24: #{tpu_custom_call.1} parent=5 // pred_fallthru
        _
      %p986 = scmp.le.s32.totalorder 2, %s20
      // Predicated region
      $region45: #{tpu_custom_call.1} parent=5 // pred_check
        %p987 = pneg %p986
      $region46: #{tpu_custom_call.1} parent=5 // pred_check_branch
        %989 = sbr.rel (%p987) target = $region48
      $region47: #{tpu_custom_call.1} parent=5 // pred_region
        %s990 = ssub.s32 %s20, 2
        // Predicated region
        $region49: #{tpu_custom_call.1} parent=47 // pred_check
          %p991 = pneg %p75
        $region50: #{tpu_custom_call.1} parent=47 // pred_check_branch
          %993 = sbr.rel (%p991) target = $region52
        $region51: #{tpu_custom_call.1} parent=47 // pred_region
          %s994 = sand.u32 %s60, 1
          %s995 = scalar_lea.sflag [#allocation4], %s994
          %s996 = sand.u32 %s60, 1
          %s997 = smul.addr %s996, 16
          %s998 = scalar_lea.vmem [#allocation5], %s997
          %999 = dma.done %s995, 256
        $region52: #{tpu_custom_call.1} parent=47 // pred_fallthru
          _
        // Predicated region
        $region53: #{tpu_custom_call.1} parent=47 // pred_check
          %p1000 = pneg %p101
        $region54: #{tpu_custom_call.1} parent=47 // pred_check_branch
          %1002 = sbr.rel (%p1000) target = $region56
        $region55: #{tpu_custom_call.1} parent=47 // pred_region
          %s1003 = sand.u32 %s86, 1
          %s1004 = scalar_lea.sflag [#allocation7], %s1003
          %s1005 = sand.u32 %s86, 1
          %s1006 = smul.addr %s1005, 8
          %s1007 = scalar_lea.vmem [#allocation6], %s1006
          %1008 = dma.done %s1004, 128
        $region56: #{tpu_custom_call.1} parent=47 // pred_fallthru
          _
        // Predicated region
        $region57: #{tpu_custom_call.1} parent=47 // pred_check
          %p1009 = pneg %p127
        $region58: #{tpu_custom_call.1} parent=47 // pred_check_branch
          %1011 = sbr.rel (%p1009) target = $region60
        $region59: #{tpu_custom_call.1} parent=47 // pred_region
          %p1012 = scmp.lt.s32.totalorder %s26, 7
          %s1013 = scalar_select %p1012, %s26, 7
          %s1014 = smul.addr %s1013, 4
          %s1015 = scalar_lea.vmem %s3, %s1014
        $region60: #{tpu_custom_call.1} parent=47 // pred_fallthru
          _
        // Predicated region
        $region61: #{tpu_custom_call.1} parent=47 // pred_check
          %p1016 = pneg %p153
        $region62: #{tpu_custom_call.1} parent=47 // pred_check_branch
          %1018 = sbr.rel (%p1016) target = $region64
        $region63: #{tpu_custom_call.1} parent=47 // pred_region
          %p1019 = scmp.lt.s32.totalorder %s26, 7
          %s1020 = scalar_select %p1019, %s26, 7
          %s1021 = smul.addr %s1020, 2
          %s1022 = scalar_lea.vmem %s4, %s1021
        $region64: #{tpu_custom_call.1} parent=47 // pred_fallthru
          _
      $region48: #{tpu_custom_call.1} parent=5 // pred_fallthru
        _
    $region6: #{tpu_custom_call.1} parent=1 // loop_footer
      %s24 = sadd.s32 1, %s20
    $region7: #{tpu_custom_call.1} parent=1 // loop_footer_branch
      %19 = sbr.rel target = $region3
    $region8: #{tpu_custom_call.1} parent=1 // loop_exit
      _
    %1023 = vsyncpa [#allocation3], 1
    %s1024 = scalar_lea.sflag [#allocation3], 1
    %1025 = vsyncpa %s1024, 1
    %1026 = vsyncpa [#allocation4], 1
    %s1027 = scalar_lea.sflag [#allocation4], 1
    %1028 = vsyncpa %s1027, 1
    %1029 = vsyncpa [#allocation7], 1
    %s1030 = scalar_lea.sflag [#allocation7], 1
    %1031 = vsyncpa %s1030, 1

</llo_original>
